<compile_context>
chip_gen: v7x
topology: tpu7x:2x2x1
jax: 0.10.0
libtpu: 0.0.40
codegen_flags: <defaults>
</compile_context>

<pallas_src>
import jax
import jax.numpy as jnp
from jax import lax
from jax.experimental import pallas as pl
from jax.experimental.pallas import tpu as pltpu


def _round_up(x, m):
    return (x + m - 1) // m * m


def semantic_attention_kernel(z_ref, w1_ref, b1_ref, w2_ref, o_ref):
    # z_ref:  (BLOCK_N, M*D_p) f32   lane-packed, each semantic a 128-aligned column slab
    # w1_ref: (H_p, D_p)       bf16  resident (torch [out, in] layout, no transpose)
    # b1_ref: (1, H_p)         f32   resident
    # w2_ref: (1, H_p)         f32   resident
    # o_ref:  (BLOCK_N, D_p)   f32
    d_p = o_ref.shape[1]
    m_sem = z_ref.shape[1] // d_p

    w1 = w1_ref[...]
    b1 = b1_ref[...]
    w2 = w2_ref[...]
    contract_in = (((1,), (1,)), ((), ()))  # contract torch 'in' axis directly

    # ---- per-semantic attention scores (M is small & static -> unrolled) ----
    scores = []
    for m in range(m_sem):
        zm = z_ref[:, m * d_p:(m + 1) * d_p]                      # (BLOCK_N, D_p), lane-aligned
        h = lax.dot_general(zm.astype(jnp.bfloat16), w1, contract_in,
                            preferred_element_type=jnp.float32)   # MXU bf16, f32 accumulate
        h = jnp.tanh(h + b1)                                      # (BLOCK_N, H_p)
        # width-1 projection on VPU + lane reduce (XLU) instead of a full MXU pass
        s = jnp.sum(h * w2, axis=-1, keepdims=True)               # (BLOCK_N, 1)
        scores.append(s)

    # ---- numerically stable softmax over the M semantics ----
    mx = scores[0]
    for m in range(1, m_sem):
        mx = jnp.maximum(mx, scores[m])
    exps = [jnp.exp(s - mx) for s in scores]
    denom = exps[0]
    for m in range(1, m_sem):
        denom = denom + exps[m]
    inv_denom = pl.reciprocal(denom, approx=True)                 # EUP slot, ~free

    # ---- out = sum_m beta_m * z[:, m, :]  (re-index the ref per use, f32) ----
    acc = (exps[0] * inv_denom) * z_ref[:, 0:d_p]
    for m in range(1, m_sem):
        acc = acc + (exps[m] * inv_denom) * z_ref[:, m * d_p:(m + 1) * d_p]
    o_ref[...] = acc.astype(o_ref.dtype)


def semantic_attention(z, w1, b1, w2, *, max_block_n=1024, lane=128):
    """z: [N, M, D]; w1: [H, D] (torch [out,in]); b1: [H]; w2: [1, H] (torch, bias=False)."""
    N, M, D = z.shape
    H = w1.shape[0]

    # Lane-dense padding (exact: padded feature/hidden columns contribute zero).
    D_p = _round_up(D, lane)
    H_p = _round_up(H, lane)

    # Big tiles for HBM-roofline efficiency, but keep >= 2 grid steps so the
    # "parallel" axis can shard across both v7x TensorCores (v5e/v6e unaffected).
    block_n = max(lane, min(max_block_n, _round_up(pl.cdiv(N, 2), lane)))
    N_p = _round_up(N, block_n)

    # Pad only when needed, then do the free contiguous reshape to a 2D lane-packed slab.
    z_p = z if D_p == D else jnp.pad(z, ((0, 0), (0, 0), (0, D_p - D)))
    z2 = z_p.reshape(N, M * D_p)
    if N_p != N:
        z2 = jnp.pad(z2, ((0, N_p - N), (0, 0)))

    w1_p = jnp.pad(w1, ((0, H_p - H), (0, D_p - D))).astype(jnp.bfloat16)
    b1_p = jnp.pad(b1.reshape(1, H), ((0, 0), (0, H_p - H))).astype(jnp.float32)
    w2_p = jnp.pad(w2.reshape(1, H), ((0, 0), (0, H_p - H))).astype(jnp.float32)

    grid = (N_p // block_n,)
    out = pl.pallas_call(
        semantic_attention_kernel,
        out_shape=jax.ShapeDtypeStruct((N_p, D_p), jnp.float32),
        grid_spec=pltpu.PrefetchScalarGridSpec(
            num_scalar_prefetch=0,
            grid=grid,
            in_specs=[
                pl.BlockSpec((block_n, M * D_p), lambda i: (i, 0)),  # z node-block (pipelined)
                pl.BlockSpec((H_p, D_p), lambda i: (0, 0)),          # W1 (resident, bf16)
                pl.BlockSpec((1, H_p), lambda i: (0, 0)),            # b1 (resident)
                pl.BlockSpec((1, H_p), lambda i: (0, 0)),            # W2 (resident)
            ],
            out_specs=pl.BlockSpec((block_n, D_p), lambda i: (i, 0)),
        ),
        compiler_params=pltpu.CompilerParams(
            dimension_semantics=("parallel",),
        ),
    )(z2, w1_p, b1_p, w2_p)
    return out[:N, :D]


if __name__ == "__main__":
    key = jax.random.PRNGKey(0)
    N, M, D, H = 256, 4, 64, 128  # nodes, semantics (metapaths), in_size, hidden_size
    k_z, k_w1, k_b1, k_w2 = jax.random.split(key, 4)

    z = jax.random.normal(k_z, (N, M, D), jnp.float32)

    # nn.Linear default-style init bounds (values irrelevant to kernel correctness).
    bound1 = 1.0 / (D ** 0.5)
    w1 = jax.random.uniform(k_w1, (H, D), jnp.float32, -bound1, bound1)   # torch layout [out, in]
    b1 = jax.random.uniform(k_b1, (H,), jnp.float32, -bound1, bound1)
    bound2 = 1.0 / (H ** 0.5)
    w2 = jax.random.uniform(k_w2, (1, H), jnp.float32, -bound2, bound2)   # Linear(H, 1, bias=False)

    out = semantic_attention(z, w1, b1, w2)
    jax.block_until_ready(out)

    # plain-JAX f32 reference (score path in the kernel uses bf16 MXU operands,
    # so compare with a bf16-appropriate tolerance; softmax is forgiving).
    hp = jnp.tanh(
        jnp.einsum("nmd,hd->nmh", z, w1, precision=lax.Precision.HIGHEST) + b1[None, None, :]
    )
    w = jnp.einsum("nmh,oh->nmo", hp, w2, precision=lax.Precision.HIGHEST)  # (N, M, 1)
    beta = jax.nn.softmax(w, axis=1)
    ref = jnp.sum(beta * z, axis=1)

    assert jnp.allclose(out, ref, atol=1e-2, rtol=1e-2), "Pallas kernel mismatch vs reference"
    print("KERNEL_OK")
</pallas_src>

<mosaic_0001>
module attributes {stable_mosaic.version = 11 : i64} {
  func.func @semantic_attention_kernel(%arg0: i32, %arg1: memref<128x512xf32, #tpu.memory_space<vmem>>, %arg2: memref<128x128xbf16, #tpu.memory_space<vmem>>, %arg3: memref<1x128xf32, #tpu.memory_space<vmem>>, %arg4: memref<1x128xf32, #tpu.memory_space<vmem>>, %arg5: memref<128x128xf32, #tpu.memory_space<vmem>>) attributes {dimension_semantics = [#tpu.dimension_semantics<parallel>], iteration_bounds = array<i64: 2>, scalar_prefetch = 0 : i64, scratch_operands = 0 : i64, tpu.core_type = #tpu.core_type<tc>, window_params = [{transform_indices = @transform_0, window_bounds = array<i64: 128, 512>}, {pipeline_mode = #tpu.pipeline_mode<synchronous>, transform_indices = @transform_1, window_bounds = array<i64: 128, 128>}, {pipeline_mode = #tpu.pipeline_mode<synchronous>, transform_indices = @transform_2, window_bounds = array<i64: 1, 128>}, {pipeline_mode = #tpu.pipeline_mode<synchronous>, transform_indices = @transform_3, window_bounds = array<i64: 1, 128>}, {transform_indices = @transform_4, window_bounds = array<i64: 128, 128>}]} {
    %c0 = arith.constant 0 : index
    %c0_0 = arith.constant 0 : index
    %0 = vector.load %arg2[%c0, %c0_0] : memref<128x128xbf16, #tpu.memory_space<vmem>>, vector<128x128xbf16>
    %c0_1 = arith.constant 0 : index
    %c0_2 = arith.constant 0 : index
    %1 = vector.load %arg3[%c0_1, %c0_2] : memref<1x128xf32, #tpu.memory_space<vmem>>, vector<1x128xf32>
    %c0_3 = arith.constant 0 : index
    %c0_4 = arith.constant 0 : index
    %2 = vector.load %arg4[%c0_3, %c0_4] : memref<1x128xf32, #tpu.memory_space<vmem>>, vector<1x128xf32>
    %c0_5 = arith.constant 0 : index
    %c0_6 = arith.constant 0 : index
    %3 = vector.load %arg1[%c0_5, %c0_6] : memref<128x512xf32, #tpu.memory_space<vmem>>, vector<128x128xf32>
    %4 = arith.truncf %3 : vector<128x128xf32> to vector<128x128xbf16>
    %cst = arith.constant dense<0.000000e+00> : vector<128x128xf32>
    %5 = tpu.matmul %4, %0, %cst {dimension_numbers = #tpu.dot_dimension_numbers<[1], [1], [0], [0], [0, 0, 1, 0], [], []>} : vector<128x128xbf16>, vector<128x128xbf16>, vector<128x128xf32> -> vector<128x128xf32>
    %6 = vector.broadcast %1 : vector<1x128xf32> to vector<128x128xf32>
    %7 = arith.addf %5, %6 : vector<128x128xf32>
    %8 = math.tanh %7 : vector<128x128xf32>
    %9 = vector.broadcast %2 : vector<1x128xf32> to vector<128x128xf32>
    %10 = arith.mulf %8, %9 : vector<128x128xf32>
    %cst_7 = arith.constant dense<0.000000e+00> : vector<128xf32>
    %11 = vector.multi_reduction <add>, %10, %cst_7 [1] : vector<128x128xf32> to vector<128xf32>
    %12 = vector.shape_cast %11 : vector<128xf32> to vector<128x1xf32>
    %c0_8 = arith.constant 0 : index
    %c128 = arith.constant 128 : index
    %13 = vector.load %arg1[%c0_8, %c128] : memref<128x512xf32, #tpu.memory_space<vmem>>, vector<128x128xf32>
    %14 = arith.truncf %13 : vector<128x128xf32> to vector<128x128xbf16>
    %cst_9 = arith.constant dense<0.000000e+00> : vector<128x128xf32>
    %15 = tpu.matmul %14, %0, %cst_9 {dimension_numbers = #tpu.dot_dimension_numbers<[1], [1], [0], [0], [0, 0, 1, 0], [], []>} : vector<128x128xbf16>, vector<128x128xbf16>, vector<128x128xf32> -> vector<128x128xf32>
    %16 = vector.broadcast %1 : vector<1x128xf32> to vector<128x128xf32>
    %17 = arith.addf %15, %16 : vector<128x128xf32>
    %18 = math.tanh %17 : vector<128x128xf32>
    %19 = vector.broadcast %2 : vector<1x128xf32> to vector<128x128xf32>
    %20 = arith.mulf %18, %19 : vector<128x128xf32>
    %cst_10 = arith.constant dense<0.000000e+00> : vector<128xf32>
    %21 = vector.multi_reduction <add>, %20, %cst_10 [1] : vector<128x128xf32> to vector<128xf32>
    %22 = vector.shape_cast %21 : vector<128xf32> to vector<128x1xf32>
    %c0_11 = arith.constant 0 : index
    %c256 = arith.constant 256 : index
    %23 = vector.load %arg1[%c0_11, %c256] : memref<128x512xf32, #tpu.memory_space<vmem>>, vector<128x128xf32>
    %24 = arith.truncf %23 : vector<128x128xf32> to vector<128x128xbf16>
    %cst_12 = arith.constant dense<0.000000e+00> : vector<128x128xf32>
    %25 = tpu.matmul %24, %0, %cst_12 {dimension_numbers = #tpu.dot_dimension_numbers<[1], [1], [0], [0], [0, 0, 1, 0], [], []>} : vector<128x128xbf16>, vector<128x128xbf16>, vector<128x128xf32> -> vector<128x128xf32>
    %26 = vector.broadcast %1 : vector<1x128xf32> to vector<128x128xf32>
    %27 = arith.addf %25, %26 : vector<128x128xf32>
    %28 = math.tanh %27 : vector<128x128xf32>
    %29 = vector.broadcast %2 : vector<1x128xf32> to vector<128x128xf32>
    %30 = arith.mulf %28, %29 : vector<128x128xf32>
    %cst_13 = arith.constant dense<0.000000e+00> : vector<128xf32>
    %31 = vector.multi_reduction <add>, %30, %cst_13 [1] : vector<128x128xf32> to vector<128xf32>
    %32 = vector.shape_cast %31 : vector<128xf32> to vector<128x1xf32>
    %c0_14 = arith.constant 0 : index
    %c384 = arith.constant 384 : index
    %33 = vector.load %arg1[%c0_14, %c384] : memref<128x512xf32, #tpu.memory_space<vmem>>, vector<128x128xf32>
    %34 = arith.truncf %33 : vector<128x128xf32> to vector<128x128xbf16>
    %cst_15 = arith.constant dense<0.000000e+00> : vector<128x128xf32>
    %35 = tpu.matmul %34, %0, %cst_15 {dimension_numbers = #tpu.dot_dimension_numbers<[1], [1], [0], [0], [0, 0, 1, 0], [], []>} : vector<128x128xbf16>, vector<128x128xbf16>, vector<128x128xf32> -> vector<128x128xf32>
    %36 = vector.broadcast %1 : vector<1x128xf32> to vector<128x128xf32>
    %37 = arith.addf %35, %36 : vector<128x128xf32>
    %38 = math.tanh %37 : vector<128x128xf32>
    %39 = vector.broadcast %2 : vector<1x128xf32> to vector<128x128xf32>
    %40 = arith.mulf %38, %39 : vector<128x128xf32>
    %cst_16 = arith.constant dense<0.000000e+00> : vector<128xf32>
    %41 = vector.multi_reduction <add>, %40, %cst_16 [1] : vector<128x128xf32> to vector<128xf32>
    %42 = vector.shape_cast %41 : vector<128xf32> to vector<128x1xf32>
    %43 = arith.maximumf %12, %22 : vector<128x1xf32>
    %44 = arith.maximumf %43, %32 : vector<128x1xf32>
    %45 = arith.maximumf %44, %42 : vector<128x1xf32>
    %46 = arith.subf %12, %45 : vector<128x1xf32>
    %47 = math.exp %46 : vector<128x1xf32>
    %48 = arith.subf %22, %45 : vector<128x1xf32>
    %49 = math.exp %48 : vector<128x1xf32>
    %50 = arith.subf %32, %45 : vector<128x1xf32>
    %51 = math.exp %50 : vector<128x1xf32>
    %52 = arith.subf %42, %45 : vector<128x1xf32>
    %53 = math.exp %52 : vector<128x1xf32>
    %54 = arith.addf %47, %49 : vector<128x1xf32>
    %55 = arith.addf %54, %51 : vector<128x1xf32>
    %56 = arith.addf %55, %53 : vector<128x1xf32>
    %57 = tpu.reciprocal %56 {approx = true} : vector<128x1xf32> -> vector<128x1xf32>
    %58 = arith.mulf %47, %57 : vector<128x1xf32>
    %c0_17 = arith.constant 0 : index
    %c0_18 = arith.constant 0 : index
    %59 = vector.load %arg1[%c0_17, %c0_18] : memref<128x512xf32, #tpu.memory_space<vmem>>, vector<128x128xf32>
    %60 = vector.broadcast %58 : vector<128x1xf32> to vector<128x128xf32>
    %61 = arith.mulf %60, %59 : vector<128x128xf32>
    %62 = arith.mulf %49, %57 : vector<128x1xf32>
    %c0_19 = arith.constant 0 : index
    %c128_20 = arith.constant 128 : index
    %63 = vector.load %arg1[%c0_19, %c128_20] : memref<128x512xf32, #tpu.memory_space<vmem>>, vector<128x128xf32>
    %64 = vector.broadcast %62 : vector<128x1xf32> to vector<128x128xf32>
    %65 = arith.mulf %64, %63 : vector<128x128xf32>
    %66 = arith.addf %61, %65 : vector<128x128xf32>
    %67 = arith.mulf %51, %57 : vector<128x1xf32>
    %c0_21 = arith.constant 0 : index
    %c256_22 = arith.constant 256 : index
    %68 = vector.load %arg1[%c0_21, %c256_22] : memref<128x512xf32, #tpu.memory_space<vmem>>, vector<128x128xf32>
    %69 = vector.broadcast %67 : vector<128x1xf32> to vector<128x128xf32>
    %70 = arith.mulf %69, %68 : vector<128x128xf32>
    %71 = arith.addf %66, %70 : vector<128x128xf32>
    %72 = arith.mulf %53, %57 : vector<128x1xf32>
    %c0_23 = arith.constant 0 : index
    %c384_24 = arith.constant 384 : index
    %73 = vector.load %arg1[%c0_23, %c384_24] : memref<128x512xf32, #tpu.memory_space<vmem>>, vector<128x128xf32>
    %74 = vector.broadcast %72 : vector<128x1xf32> to vector<128x128xf32>
    %75 = arith.mulf %74, %73 : vector<128x128xf32>
    %76 = arith.addf %71, %75 : vector<128x128xf32>
    %c0_25 = arith.constant 0 : index
    %c0_26 = arith.constant 0 : index
    %77 = vector.load %arg5[%c0_25, %c0_26] : memref<128x128xf32, #tpu.memory_space<vmem>>, vector<128x128xf32>
    tpu.vector_store %arg5[%c0_25, %c0_26], %76 {strides = array<i32>} : memref<128x128xf32, #tpu.memory_space<vmem>>, vector<128x128xf32>,
    return
  }
  func.func @transform_0(%arg0: i32) -> (i32, i32) {
    %c0_i32 = arith.constant 0 : i32
    %c0_i32_0 = arith.constant 0 : i32
    return %arg0, %c0_i32 : i32, i32
  }
  func.func @transform_1(%arg0: i32) -> (i32, i32) {
    %c0_i32 = arith.constant 0 : i32
    %c0_i32_0 = arith.constant 0 : i32
    %c0_i32_1 = arith.constant 0 : i32
    return %c0_i32, %c0_i32_0 : i32, i32
  }
  func.func @transform_2(%arg0: i32) -> (i32, i32) {
    %c0_i32 = arith.constant 0 : i32
    %c0_i32_0 = arith.constant 0 : i32
    %c0_i32_1 = arith.constant 0 : i32
    return %c0_i32, %c0_i32_0 : i32, i32
  }
  func.func @transform_3(%arg0: i32) -> (i32, i32) {
    %c0_i32 = arith.constant 0 : i32
    %c0_i32_0 = arith.constant 0 : i32
    %c0_i32_1 = arith.constant 0 : i32
    return %c0_i32, %c0_i32_0 : i32, i32
  }
  func.func @transform_4(%arg0: i32) -> (i32, i32) {
    %c0_i32 = arith.constant 0 : i32
    %c0_i32_0 = arith.constant 0 : i32
    return %arg0, %c0_i32 : i32, i32
  }
}

</mosaic_0001>

<llo_original>
// kernel: tpu_custom_call.1
$region0: #{tpu_custom_call.1}
  #allocation0 [shape = 'u32[]', space=smem, size = 0x4, offset = 0x4, fixed_abs, tag = 'smem constant byte address 0x4 - core index']
  #allocation1 [shape = 'u32[144,128]{1,0:T(1,128)}', space=vmem, size = 0x12000, scoped, tag = 'internal scratch']
  %s0 = inlined_call_operand.hbm [shape: f32[256,512], index: 0, kind: input, shape index: {}]
  %s1 = inlined_call_operand.hbm [shape: bf16[128,128], index: 1, kind: input, shape index: {}]
  %s2 = inlined_call_operand.vmem [shape: f32[1,128], index: 2, kind: input, shape index: {}]
  %s3 = inlined_call_operand.vmem [shape: f32[1,128], index: 3, kind: input, shape index: {}]
  %s4 = inlined_call_operand.hbm [shape: f32[256,128], index: 4, kind: output, shape index: {}]
  %s5 = sld [smem:[#allocation0]]
  $region57: #{tpu_custom_call.1} parent=0
    _
  %s7 = ssub.s32 1, %s5
  %s8 = scalar_select 0, %s7, %s5
  $region1: #{tpu_custom_call.1} parent=0
    #allocation2 [shape = 'u8[524288]{0}', space=vmem, size = 0x80000, scoped, tag = 'input window, operand 0']
    #allocation3 [shape = 's32[2]{0}', space=sflag, size = 0x8, scoped, tag = 'scoped memory for tpu_custom_call.1']
    #allocation4 [shape = 's32[2]{0}', space=sflag, size = 0x8, scoped, tag = 'scoped memory for tpu_custom_call.1']
    #allocation5 [shape = 'u8[32768]{0}', space=vmem, size = 0x8000, scoped, tag = 'input window, operand 1, single buffered']
    #allocation6 [shape = 's32[1]{0}', space=sflag, size = 0x4, scoped, tag = 'scoped memory for tpu_custom_call.1']
    #allocation7 [shape = 'u8[131072]{0}', space=vmem, size = 0x20000, scoped, tag = 'output window, operand 0']
    %9 = vsyncpa [#allocation3], 0
    %s10 = scalar_lea.sflag [#allocation3], 1
    %11 = vsyncpa %s10, 0
    %12 = vsyncpa [#allocation6], 0
    %13 = vsyncpa [#allocation4], 0
    %s14 = scalar_lea.sflag [#allocation4], 1
    %15 = vsyncpa %s14, 0
    loop: start=0, step=1, limit=4
    $region2: #{tpu_custom_call.1} parent=1 // loop_pre_header
      _
    $region3: #{tpu_custom_call.1} parent=1 // loop_header
      %s17 = sphi 0, %s21
      %p18 = scmp.ge.s32.totalorder %s17, 4
      %s27 = sphi 0, %s29
      %s30 = sphi 0, %s27
      %s31 = sphi 0, %s30
      %s47 = sphi 0, %s31
      %s51 = sphi 0, %s51
      %s53 = sphi 0, %s51
      %s54 = sphi 0, %s53
      %s68 = sphi 0, %s54
      %s72 = sphi 0, %s72
      %s74 = sphi 0, %s72
      %s75 = sphi 0, %s74
      %s89 = sphi 0, %s75
      %s93 = sphi 0, %s93
      %s95 = sphi 0, %s93
      %s96 = sphi 0, %s95
      %s110 = sphi 0, %s96
      %s116 = sphi 0, %s118
      %s119 = sphi 0, %s116
      %s120 = sphi 0, %s119
      %s136 = sphi 0, %s120
    $region4: #{tpu_custom_call.1} parent=1 // loop_header_branch
      %20 = sbr.rel (%p18) target = $region8
    $region5: #{tpu_custom_call.1} parent=1 // loop_body
      %s22 = ssub.s32 %s17, 1
      %s23 = ssub.s32 %s17, 2
      %s24 = sadd.s32 %s17, 1
      %s25 = ssub.s32 %s17, %s24
      %p26 = scmp.eq.s32.totalorder %s25, 0
      %s28 = sadd.s32 %s27, 1
      %s29 = scalar_select %p26, %s27, %s28
      %p32 = pneg %p26
      %p33 = scmp.eq.s32.totalorder %s17, 1
      %p34 = por %p32, %p33
      %p35 = scmp.ne.s32.totalorder %s27, %s30
      %p36 = scmp.eq.s32.totalorder %s17, 0
      %p37 = por %p35, %p36
      %p38 = scmp.ne.s32.totalorder %s27, %s30
      %p39 = scmp.eq.s32.totalorder %s22, 1
      %p40 = por %p38, %p39
      %p41 = scmp.ne.s32.totalorder %s30, %s31
      %p42 = scmp.eq.s32.totalorder %s22, 0
      %p43 = por %p41, %p42
      %p44 = scmp.ne.s32.totalorder %s30, %s31
      %p45 = scmp.eq.s32.totalorder %s23, 1
      %p46 = por %p44, %p45
      %p48 = scmp.ne.s32.totalorder %s31, %s47
      %p49 = scmp.eq.s32.totalorder %s23, 0
      %p50 = por %p48, %p49
      %s52 = sadd.s32 %s51, 1
      %p55 = scmp.eq.s32.totalorder %s17, 1
      %p56 = scmp.ne.s32.totalorder %s51, %s53
      %p57 = scmp.eq.s32.totalorder %s17, 0
      %p58 = por %p56, %p57
      %p59 = scmp.ne.s32.totalorder %s51, %s53
      %p60 = scmp.eq.s32.totalorder %s22, 1
      %p61 = por %p59, %p60
      %p62 = scmp.ne.s32.totalorder %s53, %s54
      %p63 = scmp.eq.s32.totalorder %s22, 0
      %p64 = por %p62, %p63
      %p65 = scmp.ne.s32.totalorder %s53, %s54
      %p66 = scmp.eq.s32.totalorder %s23, 1
      %p67 = por %p65, %p66
      %p69 = scmp.ne.s32.totalorder %s54, %s68
      %p70 = scmp.eq.s32.totalorder %s23, 0
      %p71 = por %p69, %p70
      %s73 = sadd.s32 %s72, 1
      %p76 = scmp.eq.s32.totalorder %s17, 1
      %p77 = scmp.ne.s32.totalorder %s72, %s74
      %p78 = scmp.eq.s32.totalorder %s17, 0
      %p79 = por %p77, %p78
      %p80 = scmp.ne.s32.totalorder %s72, %s74
      %p81 = scmp.eq.s32.totalorder %s22, 1
      %p82 = por %p80, %p81
      %p83 = scmp.ne.s32.totalorder %s74, %s75
      %p84 = scmp.eq.s32.totalorder %s22, 0
      %p85 = por %p83, %p84
      %p86 = scmp.ne.s32.totalorder %s74, %s75
      %p87 = scmp.eq.s32.totalorder %s23, 1
      %p88 = por %p86, %p87
      %p90 = scmp.ne.s32.totalorder %s75, %s89
      %p91 = scmp.eq.s32.totalorder %s23, 0
      %p92 = por %p90, %p91
      %s94 = sadd.s32 %s93, 1
      %p97 = scmp.eq.s32.totalorder %s17, 1
      %p98 = scmp.ne.s32.totalorder %s93, %s95
      %p99 = scmp.eq.s32.totalorder %s17, 0
      %p100 = por %p98, %p99
      %p101 = scmp.ne.s32.totalorder %s93, %s95
      %p102 = scmp.eq.s32.totalorder %s22, 1
      %p103 = por %p101, %p102
      %p104 = scmp.ne.s32.totalorder %s95, %s96
      %p105 = scmp.eq.s32.totalorder %s22, 0
      %p106 = por %p104, %p105
      %p107 = scmp.ne.s32.totalorder %s95, %s96
      %p108 = scmp.eq.s32.totalorder %s23, 1
      %p109 = por %p107, %p108
      %p111 = scmp.ne.s32.totalorder %s96, %s110
      %p112 = scmp.eq.s32.totalorder %s23, 0
      %p113 = por %p111, %p112
      %s114 = ssub.s32 %s17, %s24
      %p115 = scmp.eq.s32.totalorder %s114, 0
      %s117 = sadd.s32 %s116, 1
      %s118 = scalar_select %p115, %s116, %s117
      %p121 = pneg %p115
      %p122 = scmp.eq.s32.totalorder %s17, 1
      %p123 = por %p121, %p122
      %p124 = scmp.ne.s32.totalorder %s116, %s119
      %p125 = scmp.eq.s32.totalorder %s17, 0
      %p126 = por %p124, %p125
      %p127 = scmp.ne.s32.totalorder %s116, %s119
      %p128 = scmp.eq.s32.totalorder %s22, 1
      %p129 = por %p127, %p128
      %p130 = scmp.ne.s32.totalorder %s119, %s120
      %p131 = scmp.eq.s32.totalorder %s22, 0
      %p132 = por %p130, %p131
      %p133 = scmp.ne.s32.totalorder %s119, %s120
      %p134 = scmp.eq.s32.totalorder %s23, 1
      %p135 = por %p133, %p134
      %p137 = scmp.ne.s32.totalorder %s120, %s136
      %p138 = scmp.eq.s32.totalorder %s23, 0
      %p139 = por %p137, %p138
      %p140 = scmp.le.s32.totalorder 1, %s17
      %p141 = scmp.lt.s32.totalorder %s17, 3
      %p142 = pnand %p140, %p141
      %p143 = pneg %p142
      // Predicated region
      $region9: #{tpu_custom_call.1} parent=5 // pred_check
        _
      $region10: #{tpu_custom_call.1} parent=5 // pred_check_branch
        %145 = sbr.rel (%p142) target = $region12
      $region11: #{tpu_custom_call.1} parent=5 // pred_region
        %s146 = ssub.s32 %s17, 1
        // Predicated region
        $region13: #{tpu_custom_call.1} parent=11 // pred_check
          %p147 = pneg %p64
        $region14: #{tpu_custom_call.1} parent=11 // pred_check_branch
          %149 = sbr.rel (%p147) target = $region16
        $region15: #{tpu_custom_call.1} parent=11 // pred_region
          %s151 = ssub.s32 1024, 1024
          %152 = vsyncadd [#allocation6], %s151
          %s153 = sshll.u32 [#allocation5], 4
          %s154 = int_to_ptr.vmem [resolvable:$true] %s153
          %159 = dma.hbm_to_vmem [thread:$0]  %s1, 1024, %s154, [#allocation6], 64, 64, 4
        $region16: #{tpu_custom_call.1} parent=11 // pred_fallthru
          _
        // Predicated region
        $region17: #{tpu_custom_call.1} parent=11 // pred_check
          %p160 = pneg %p85
        $region18: #{tpu_custom_call.1} parent=11 // pred_check_branch
          %162 = sbr.rel (%p160) target = $region20
        $region19: #{tpu_custom_call.1} parent=11 // pred_region
          _
        $region20: #{tpu_custom_call.1} parent=11 // pred_fallthru
          _
        // Predicated region
        $region21: #{tpu_custom_call.1} parent=11 // pred_check
          %p163 = pneg %p106
        $region22: #{tpu_custom_call.1} parent=11 // pred_check_branch
          %165 = sbr.rel (%p163) target = $region24
        $region23: #{tpu_custom_call.1} parent=11 // pred_region
          _
        $region24: #{tpu_custom_call.1} parent=11 // pred_fallthru
          _
      $region12: #{tpu_custom_call.1} parent=5 // pred_fallthru
        _
      %p166 = scmp.lt.s32.totalorder %s17, 2
      // Predicated region
      $region25: #{tpu_custom_call.1} parent=5 // pred_check
        %p167 = pneg %p166
      $region26: #{tpu_custom_call.1} parent=5 // pred_check_branch
        %169 = sbr.rel (%p167) target = $region28
      $region27: #{tpu_custom_call.1} parent=5 // pred_region
        // Predicated region
        $region29: #{tpu_custom_call.1} parent=27 // pred_check
          %p170 = pneg %p37
        $region30: #{tpu_custom_call.1} parent=27 // pred_check_branch
          %172 = sbr.rel (%p170) target = $region32
        $region31: #{tpu_custom_call.1} parent=27 // pred_region
          %s173 = sand.u32 %s27, 1
          %s174 = scalar_lea.sflag [#allocation3], %s173
          %s175 = sand.u32 %s27, 1
          %s176 = smul.addr %s175, 512
          %s177 = scalar_lea.vmem [#allocation2], %s176
          %s178 = smul.u32 16, %s17
          %s180 = ssub.s32 8192, 8192
          %181 = vsyncadd %s174, %s180
          %s182 = smul.addr %s178, 4
          %s183 = smul.addr %s182, 128
          %s184 = scalar_lea.hbm %s0, %s183
          %s185 = sshll.u32 %s177, 4
          %s186 = int_to_ptr.vmem [resolvable:$true] %s185
          %191 = dma.hbm_to_vmem [thread:$0]  %s184, 8192, %s186, %s174, 512, 512, 32
        $region32: #{tpu_custom_call.1} parent=27 // pred_fallthru
          _
      $region28: #{tpu_custom_call.1} parent=5 // pred_fallthru
        _
      %p192 = scmp.le.s32.totalorder 1, %s17
      %p193 = scmp.lt.s32.totalorder %s17, 3
      %p194 = pnand %p192, %p193
      %p195 = pneg %p194
      // Predicated region
      $region33: #{tpu_custom_call.1} parent=5 // pred_check
        _
      $region34: #{tpu_custom_call.1} parent=5 // pred_check_branch
        %197 = sbr.rel (%p194) target = $region36
      $region35: #{tpu_custom_call.1} parent=5 // pred_region
        %s198 = ssub.s32 %s17, 1
        %s199 = sand.u32 %s30, 1
        %s200 = scalar_lea.sflag [#allocation3], %s199
        %s201 = sand.u32 %s30, 1
        %s202 = smul.addr %s201, 512
        %s203 = scalar_lea.vmem [#allocation2], %s202
        // Predicated region
        $region37: #{tpu_custom_call.1} parent=35 // pred_check
          %p204 = pneg %p43
        $region38: #{tpu_custom_call.1} parent=35 // pred_check_branch
          %206 = sbr.rel (%p204) target = $region40
        $region39: #{tpu_custom_call.1} parent=35 // pred_region
          %207 = dma.done %s200, 8192
        $region40: #{tpu_custom_call.1} parent=35 // pred_fallthru
          _
        // Predicated region
        $region41: #{tpu_custom_call.1} parent=35 // pred_check
          %p208 = pneg %p64
        $region42: #{tpu_custom_call.1} parent=35 // pred_check_branch
          %210 = sbr.rel (%p208) target = $region44
        $region43: #{tpu_custom_call.1} parent=35 // pred_region
          %211 = dma.done [#allocation6], 1024
        $region44: #{tpu_custom_call.1} parent=35 // pred_fallthru
          _
        %s212 = sand.u32 %s30, 1
        %s213 = scalar_lea.sflag [#allocation3], %s212
        %s214 = sand.u32 %s30, 1
        %s215 = smul.addr %s214, 512
        %s216 = scalar_lea.vmem [#allocation2], %s215
        %p217 = pneg %p43
        %p218 = pneg %p40
        %p219 = pneg %p64
        %p220 = pneg %p61
        %p221 = pneg %p85
        %p222 = pneg %p82
        %p223 = pneg %p106
        %p224 = pneg %p103
        %p225 = pneg %p132
        %p226 = pneg %p129
        %s227 = sand.u32 %s119, 1
        %s228 = scalar_lea.sflag [#allocation4], %s227
        %s229 = sand.u32 %s119, 1
        %s230 = smul.addr %s229, 128
        %s231 = scalar_lea.vmem [#allocation7], %s230
        %s232 = smul.u32 16, %s22
        %s233 = smul.u32 16, %s22
        %v235 = vld [vmem:[#allocation5] sm:$0xf]
        %v236 = vld [vmem:[#allocation5 + $0x4] sm:$0xf]
        %v237 = vld [vmem:[#allocation5 + $0x8] sm:$0xf]
        %v238 = vld [vmem:[#allocation5 + $0xc] sm:$0xf]
        %v239 = vld [vmem:[#allocation5 + $0x10] sm:$0xf]
        %v240 = vld [vmem:[#allocation5 + $0x14] sm:$0xf]
        %v241 = vld [vmem:[#allocation5 + $0x18] sm:$0xf]
        %v242 = vld [vmem:[#allocation5 + $0x1c] sm:$0xf]
        %v243 = vld [vmem:[#allocation5 + $0x20] sm:$0xf]
        %v244 = vld [vmem:[#allocation5 + $0x24] sm:$0xf]
        %v245 = vld [vmem:[#allocation5 + $0x28] sm:$0xf]
        %v246 = vld [vmem:[#allocation5 + $0x2c] sm:$0xf]
        %v247 = vld [vmem:[#allocation5 + $0x30] sm:$0xf]
        %v248 = vld [vmem:[#allocation5 + $0x34] sm:$0xf]
        %v249 = vld [vmem:[#allocation5 + $0x38] sm:$0xf]
        %v250 = vld [vmem:[#allocation5 + $0x3c] sm:$0xf]
        %v251 = vld [vmem:[%s2] sm:$0x1]
        %v252 = vld [vmem:[%s3] sm:$0x1]
        %v253 = vld [vmem:[%s203] sm:$0xff]
        %v254 = vld [vmem:[%s203 + $0x20] sm:$0xff]
        %v255 = vld [vmem:[%s203 + $0x40] sm:$0xff]
        %v256 = vld [vmem:[%s203 + $0x60] sm:$0xff]
        %v257 = vld [vmem:[%s203 + $0x80] sm:$0xff]
        %v258 = vld [vmem:[%s203 + $0xa0] sm:$0xff]
        %v259 = vld [vmem:[%s203 + $0xc0] sm:$0xff]
        %v260 = vld [vmem:[%s203 + $0xe0] sm:$0xff]
        %v261 = vld [vmem:[%s203 + $0x100] sm:$0xff]
        %v262 = vld [vmem:[%s203 + $0x120] sm:$0xff]
        %v263 = vld [vmem:[%s203 + $0x140] sm:$0xff]
        %v264 = vld [vmem:[%s203 + $0x160] sm:$0xff]
        %v265 = vld [vmem:[%s203 + $0x180] sm:$0xff]
        %v266 = vld [vmem:[%s203 + $0x1a0] sm:$0xff]
        %v267 = vld [vmem:[%s203 + $0x1c0] sm:$0xff]
        %v268 = vld [vmem:[%s203 + $0x1e0] sm:$0xff]
        %v269 = vpack.c.bf16 %v254, %v253
        %v270 = vpack.c.bf16 %v256, %v255
        %v271 = vpack.c.bf16 %v258, %v257
        %v272 = vpack.c.bf16 %v260, %v259
        %v273 = vpack.c.bf16 %v262, %v261
        %v274 = vpack.c.bf16 %v264, %v263
        %v275 = vpack.c.bf16 %v266, %v265
        %v276 = vpack.c.bf16 %v268, %v267
        %v278 = vlaneseq
        %v279 = vshrl.u32 %v278, 7
        %v280 = vsub.s32 0, %v279
        %v281 = vrot.slane %v251, %v280
        %v299 = vunpack.c.l.b16 %v235
        %v300 = vunpack.c.l.b16 %v236
        %v301 = vunpack.c.l.b16 %v237
        %v302 = vunpack.c.l.b16 %v238
        %v303 = vunpack.c.l.b16 %v239
        %v304 = vunpack.c.l.b16 %v240
        %v305 = vunpack.c.l.b16 %v241
        %v306 = vunpack.c.l.b16 %v242
        %v307 = vunpack.c.l.b16 %v243
        %v308 = vunpack.c.l.b16 %v244
        %v309 = vunpack.c.l.b16 %v245
        %v310 = vunpack.c.l.b16 %v246
        %v311 = vunpack.c.l.b16 %v247
        %v312 = vunpack.c.l.b16 %v248
        %v313 = vunpack.c.l.b16 %v249
        %v314 = vunpack.c.l.b16 %v250
        %v315 = vpack.c.b16 %v300, %v299
        %v316 = vpack.c.b16 %v302, %v301
        %v317 = vpack.c.b16 %v304, %v303
        %v318 = vpack.c.b16 %v306, %v305
        %v319 = vpack.c.b16 %v308, %v307
        %v320 = vpack.c.b16 %v310, %v309
        %v321 = vpack.c.b16 %v312, %v311
        %v322 = vpack.c.b16 %v314, %v313
        %331 = vmatprep.subr.bf16.mxu0 0
        %332 = vmatpush1.bf16.xpose.msra.mxu0 %v315
        %333 = vmatprep.subr.bf16.mxu0 0
        %334 = vmatpush1.bf16.xpose.msra.mxu0 %v316
        %335 = vmatprep.subr.bf16.mxu0 0
        %336 = vmatpush1.bf16.xpose.msra.mxu0 %v317
        %337 = vmatprep.subr.bf16.mxu0 0
        %338 = vmatpush1.bf16.xpose.msra.mxu0 %v318
        %339 = vmatprep.subr.bf16.mxu0 0
        %340 = vmatpush1.bf16.xpose.msra.mxu0 %v319
        %341 = vmatprep.subr.bf16.mxu0 0
        %342 = vmatpush1.bf16.xpose.msra.mxu0 %v320
        %343 = vmatprep.subr.bf16.mxu0 0
        %344 = vmatpush1.bf16.xpose.msra.mxu0 %v321
        %345 = vmatprep.subr.bf16.mxu0 0
        %346 = vmatpush1.bf16.xpose.msra.mxu0 %v322
        %347 = vmatprep.subr.bf16.mxu0 0
        %348 = vmatpush1.bf16.xpose.msra.mxu0 0
        %349 = vmatprep.subr.bf16.mxu0 0
        %350 = vmatpush1.bf16.xpose.msra.mxu0 0
        %351 = vmatprep.subr.bf16.mxu0 0
        %352 = vmatpush1.bf16.xpose.msra.mxu0 0
        %353 = vmatprep.subr.bf16.mxu0 0
        %354 = vmatpush1.bf16.xpose.msra.mxu0 0
        %355 = vmatprep.subr.bf16.mxu0 0
        %356 = vmatpush1.bf16.xpose.msra.mxu0 0
        %357 = vmatprep.subr.bf16.mxu0 0
        %358 = vmatpush1.bf16.xpose.msra.mxu0 0
        %359 = vmatprep.subr.bf16.mxu0 0
        %360 = vmatpush1.bf16.xpose.msra.mxu0 0
        %361 = vmatprep.subr.bf16.mxu0 0
        %362 = vmatpush1.bf16.xpose.msra.mxu0 0
        %363 = vmatprep.mubr.bf16.mxu0 0
        %364 = vmatmul.mubr.bf16.gmra.mrb[0].mxu0 %v269
        %v365 = vpop.f32.mrb[0].mxu0
        %v366 = vadd.f32 %v281, %v365
        %v367 = vpop.f32.mrb[0].mxu0
        %v368 = vpop.f32.mrb[0].mxu0
        %v369 = vadd.f32 %v281, %v368
        %v370 = vpop.f32.mrb[0].mxu0
        %371 = vmatprep.mubr.bf16.mxu0 0
        %372 = vmatmul.mubr.bf16.gmra.mrb[0].mxu0 %v270
        %v373 = vpop.f32.mrb[0].mxu0
        %v374 = vadd.f32 %v281, %v373
        %v375 = vpop.f32.mrb[0].mxu0
        %v376 = vpop.f32.mrb[0].mxu0
        %v377 = vadd.f32 %v281, %v376
        %v378 = vpop.f32.mrb[0].mxu0
        %379 = vmatprep.mubr.bf16.mxu0 0
        %380 = vmatmul.mubr.bf16.gmra.mrb[0].mxu0 %v271
        %v381 = vpop.f32.mrb[0].mxu0
        %v382 = vadd.f32 %v281, %v381
        %v383 = vpop.f32.mrb[0].mxu0
        %v384 = vpop.f32.mrb[0].mxu0
        %v385 = vadd.f32 %v281, %v384
        %v386 = vpop.f32.mrb[0].mxu0
        %387 = vmatprep.mubr.bf16.mxu0 0
        %388 = vmatmul.mubr.bf16.gmra.mrb[0].mxu0 %v272
        %v389 = vpop.f32.mrb[0].mxu0
        %v390 = vadd.f32 %v281, %v389
        %v391 = vpop.f32.mrb[0].mxu0
        %v392 = vpop.f32.mrb[0].mxu0
        %v393 = vadd.f32 %v281, %v392
        %v394 = vpop.f32.mrb[0].mxu0
        %395 = vmatprep.mubr.bf16.mxu0 0
        %396 = vmatmul.mubr.bf16.gmra.mrb[0].mxu0 %v273
        %v397 = vpop.f32.mrb[0].mxu0
        %v398 = vadd.f32 %v281, %v397
        %v399 = vpop.f32.mrb[0].mxu0
        %v400 = vpop.f32.mrb[0].mxu0
        %v401 = vadd.f32 %v281, %v400
        %v402 = vpop.f32.mrb[0].mxu0
        %403 = vmatprep.mubr.bf16.mxu0 0
        %404 = vmatmul.mubr.bf16.gmra.mrb[0].mxu0 %v274
        %v405 = vpop.f32.mrb[0].mxu0
        %v406 = vadd.f32 %v281, %v405
        %v407 = vpop.f32.mrb[0].mxu0
        %v408 = vpop.f32.mrb[0].mxu0
        %v409 = vadd.f32 %v281, %v408
        %v410 = vpop.f32.mrb[0].mxu0
        %411 = vmatprep.mubr.bf16.mxu0 0
        %412 = vmatmul.mubr.bf16.gmra.mrb[0].mxu0 %v275
        %v413 = vpop.f32.mrb[0].mxu0
        %v414 = vadd.f32 %v281, %v413
        %v415 = vpop.f32.mrb[0].mxu0
        %v416 = vpop.f32.mrb[0].mxu0
        %v417 = vadd.f32 %v281, %v416
        %v418 = vpop.f32.mrb[0].mxu0
        %419 = vmatprep.mubr.bf16.mxu0 0
        %420 = vmatmul.mubr.bf16.gmra.mrb[0].mxu0 %v276
        %v421 = vpop.f32.mrb[0].mxu0
        %v422 = vadd.f32 %v281, %v421
        %v423 = vpop.f32.mrb[0].mxu0
        %v424 = vpop.f32.mrb[0].mxu0
        %v425 = vadd.f32 %v281, %v424
        %v426 = vpop.f32.mrb[0].mxu0
        %427 = vdwg.mxu0
        %v428 = vtanh.pop %v366
        %v429 = vtanh.pop %v369
        %v430 = vtanh.pop %v374
        %v431 = vtanh.pop %v377
        %v432 = vtanh.pop %v382
        %v433 = vtanh.pop %v385
        %v434 = vtanh.pop %v390
        %v435 = vtanh.pop %v393
        %v436 = vtanh.pop %v398
        %v437 = vtanh.pop %v401
        %v438 = vtanh.pop %v406
        %v439 = vtanh.pop %v409
        %v440 = vtanh.pop %v414
        %v441 = vtanh.pop %v417
        %v442 = vtanh.pop %v422
        %v443 = vtanh.pop %v425
        %v445 = vlaneseq
        %v446 = vshrl.u32 %v445, 7
        %v447 = vsub.s32 0, %v446
        %v448 = vrot.slane %v252, %v447
        %v450 = vmul.f32 %v428, %v448
        %v451 = vmul.f32 %v429, %v448
        %v452 = vmul.f32 %v430, %v448
        %v453 = vmul.f32 %v431, %v448
        %v454 = vmul.f32 %v432, %v448
        %v455 = vmul.f32 %v433, %v448
        %v456 = vmul.f32 %v434, %v448
        %v457 = vmul.f32 %v435, %v448
        %v458 = vmul.f32 %v436, %v448
        %v459 = vmul.f32 %v437, %v448
        %v460 = vmul.f32 %v438, %v448
        %v461 = vmul.f32 %v439, %v448
        %v462 = vmul.f32 %v440, %v448
        %v463 = vmul.f32 %v441, %v448
        %v464 = vmul.f32 %v442, %v448
        %v465 = vmul.f32 %v443, %v448
        %466 = vadd.xlane.f32.xlu0 %v450
        %v467 = vpop.xlane.xlu0 %466
        %468 = vadd.xlane.f32.xlu0 %v451
        %v469 = vpop.xlane.xlu0 %468
        %470 = vadd.xlane.f32.xlu0 %v452
        %v471 = vpop.xlane.xlu0 %470
        %472 = vadd.xlane.f32.xlu0 %v453
        %v473 = vpop.xlane.xlu0 %472
        %474 = vadd.xlane.f32.xlu0 %v454
        %v475 = vpop.xlane.xlu0 %474
        %476 = vadd.xlane.f32.xlu0 %v455
        %v477 = vpop.xlane.xlu0 %476
        %478 = vadd.xlane.f32.xlu0 %v456
        %v479 = vpop.xlane.xlu0 %478
        %480 = vadd.xlane.f32.xlu0 %v457
        %v481 = vpop.xlane.xlu0 %480
        %482 = vadd.xlane.f32.xlu0 %v458
        %v483 = vpop.xlane.xlu0 %482
        %484 = vadd.xlane.f32.xlu0 %v459
        %v485 = vpop.xlane.xlu0 %484
        %486 = vadd.xlane.f32.xlu0 %v460
        %v487 = vpop.xlane.xlu0 %486
        %488 = vadd.xlane.f32.xlu0 %v461
        %v489 = vpop.xlane.xlu0 %488
        %490 = vadd.xlane.f32.xlu0 %v462
        %v491 = vpop.xlane.xlu0 %490
        %492 = vadd.xlane.f32.xlu0 %v463
        %v493 = vpop.xlane.xlu0 %492
        %494 = vadd.xlane.f32.xlu0 %v464
        %v495 = vpop.xlane.xlu0 %494
        %496 = vadd.xlane.f32.xlu0 %v465
        %v497 = vpop.xlane.xlu0 %496
        %v498 = vld [vmem:[%s203 + $0x8] sm:$0xff]
        %v499 = vld [vmem:[%s203 + $0x28] sm:$0xff]
        %v500 = vld [vmem:[%s203 + $0x48] sm:$0xff]
        %v501 = vld [vmem:[%s203 + $0x68] sm:$0xff]
        %v502 = vld [vmem:[%s203 + $0x88] sm:$0xff]
        %v503 = vld [vmem:[%s203 + $0xa8] sm:$0xff]
        %v504 = vld [vmem:[%s203 + $0xc8] sm:$0xff]
        %v505 = vld [vmem:[%s203 + $0xe8] sm:$0xff]
        %v506 = vld [vmem:[%s203 + $0x108] sm:$0xff]
        %v507 = vld [vmem:[%s203 + $0x128] sm:$0xff]
        %v508 = vld [vmem:[%s203 + $0x148] sm:$0xff]
        %v509 = vld [vmem:[%s203 + $0x168] sm:$0xff]
        %v510 = vld [vmem:[%s203 + $0x188] sm:$0xff]
        %v511 = vld [vmem:[%s203 + $0x1a8] sm:$0xff]
        %v512 = vld [vmem:[%s203 + $0x1c8] sm:$0xff]
        %v513 = vld [vmem:[%s203 + $0x1e8] sm:$0xff]
        %v514 = vpack.c.bf16 %v499, %v498
        %v515 = vpack.c.bf16 %v501, %v500
        %v516 = vpack.c.bf16 %v503, %v502
        %v517 = vpack.c.bf16 %v505, %v504
        %v518 = vpack.c.bf16 %v507, %v506
        %v519 = vpack.c.bf16 %v509, %v508
        %v520 = vpack.c.bf16 %v511, %v510
        %v521 = vpack.c.bf16 %v513, %v512
        %522 = vmatprep.subr.bf16.mxu0 0
        %523 = vmatpush1.bf16.xpose.msra.mxu0 %v315
        %524 = vmatprep.subr.bf16.mxu0 0
        %525 = vmatpush1.bf16.xpose.msra.mxu0 %v316
        %526 = vmatprep.subr.bf16.mxu0 0
        %527 = vmatpush1.bf16.xpose.msra.mxu0 %v317
        %528 = vmatprep.subr.bf16.mxu0 0
        %529 = vmatpush1.bf16.xpose.msra.mxu0 %v318
        %530 = vmatprep.subr.bf16.mxu0 0
        %531 = vmatpush1.bf16.xpose.msra.mxu0 %v319
        %532 = vmatprep.subr.bf16.mxu0 0
        %533 = vmatpush1.bf16.xpose.msra.mxu0 %v320
        %534 = vmatprep.subr.bf16.mxu0 0
        %535 = vmatpush1.bf16.xpose.msra.mxu0 %v321
        %536 = vmatprep.subr.bf16.mxu0 0
        %537 = vmatpush1.bf16.xpose.msra.mxu0 %v322
        %538 = vmatprep.subr.bf16.mxu0 0
        %539 = vmatpush1.bf16.xpose.msra.mxu0 0
        %540 = vmatprep.subr.bf16.mxu0 0
        %541 = vmatpush1.bf16.xpose.msra.mxu0 0
        %542 = vmatprep.subr.bf16.mxu0 0
        %543 = vmatpush1.bf16.xpose.msra.mxu0 0
        %544 = vmatprep.subr.bf16.mxu0 0
        %545 = vmatpush1.bf16.xpose.msra.mxu0 0
        %546 = vmatprep.subr.bf16.mxu0 0
        %547 = vmatpush1.bf16.xpose.msra.mxu0 0
        %548 = vmatprep.subr.bf16.mxu0 0
        %549 = vmatpush1.bf16.xpose.msra.mxu0 0
        %550 = vmatprep.subr.bf16.mxu0 0
        %551 = vmatpush1.bf16.xpose.msra.mxu0 0
        %552 = vmatprep.subr.bf16.mxu0 0
        %553 = vmatpush1.bf16.xpose.msra.mxu0 0
        %554 = vmatprep.mubr.bf16.mxu0 0
        %555 = vmatmul.mubr.bf16.gmra.mrb[0].mxu0 %v514
        %v556 = vpop.f32.mrb[0].mxu0
        %v557 = vadd.f32 %v281, %v556
        %v558 = vpop.f32.mrb[0].mxu0
        %v559 = vpop.f32.mrb[0].mxu0
        %v560 = vadd.f32 %v281, %v559
        %v561 = vpop.f32.mrb[0].mxu0
        %562 = vmatprep.mubr.bf16.mxu0 0
        %563 = vmatmul.mubr.bf16.gmra.mrb[0].mxu0 %v515
        %v564 = vpop.f32.mrb[0].mxu0
        %v565 = vadd.f32 %v281, %v564
        %v566 = vpop.f32.mrb[0].mxu0
        %v567 = vpop.f32.mrb[0].mxu0
        %v568 = vadd.f32 %v281, %v567
        %v569 = vpop.f32.mrb[0].mxu0
        %570 = vmatprep.mubr.bf16.mxu0 0
        %571 = vmatmul.mubr.bf16.gmra.mrb[0].mxu0 %v516
        %v572 = vpop.f32.mrb[0].mxu0
        %v573 = vadd.f32 %v281, %v572
        %v574 = vpop.f32.mrb[0].mxu0
        %v575 = vpop.f32.mrb[0].mxu0
        %v576 = vadd.f32 %v281, %v575
        %v577 = vpop.f32.mrb[0].mxu0
        %578 = vmatprep.mubr.bf16.mxu0 0
        %579 = vmatmul.mubr.bf16.gmra.mrb[0].mxu0 %v517
        %v580 = vpop.f32.mrb[0].mxu0
        %v581 = vadd.f32 %v281, %v580
        %v582 = vpop.f32.mrb[0].mxu0
        %v583 = vpop.f32.mrb[0].mxu0
        %v584 = vadd.f32 %v281, %v583
        %v585 = vpop.f32.mrb[0].mxu0
        %586 = vmatprep.mubr.bf16.mxu0 0
        %587 = vmatmul.mubr.bf16.gmra.mrb[0].mxu0 %v518
        %v588 = vpop.f32.mrb[0].mxu0
        %v589 = vadd.f32 %v281, %v588
        %v590 = vpop.f32.mrb[0].mxu0
        %v591 = vpop.f32.mrb[0].mxu0
        %v592 = vadd.f32 %v281, %v591
        %v593 = vpop.f32.mrb[0].mxu0
        %594 = vmatprep.mubr.bf16.mxu0 0
        %595 = vmatmul.mubr.bf16.gmra.mrb[0].mxu0 %v519
        %v596 = vpop.f32.mrb[0].mxu0
        %v597 = vadd.f32 %v281, %v596
        %v598 = vpop.f32.mrb[0].mxu0
        %v599 = vpop.f32.mrb[0].mxu0
        %v600 = vadd.f32 %v281, %v599
        %v601 = vpop.f32.mrb[0].mxu0
        %602 = vmatprep.mubr.bf16.mxu0 0
        %603 = vmatmul.mubr.bf16.gmra.mrb[0].mxu0 %v520
        %v604 = vpop.f32.mrb[0].mxu0
        %v605 = vadd.f32 %v281, %v604
        %v606 = vpop.f32.mrb[0].mxu0
        %v607 = vpop.f32.mrb[0].mxu0
        %v608 = vadd.f32 %v281, %v607
        %v609 = vpop.f32.mrb[0].mxu0
        %610 = vmatprep.mubr.bf16.mxu0 0
        %611 = vmatmul.mubr.bf16.gmra.mrb[0].mxu0 %v521
        %v612 = vpop.f32.mrb[0].mxu0
        %v613 = vadd.f32 %v281, %v612
        %v614 = vpop.f32.mrb[0].mxu0
        %v615 = vpop.f32.mrb[0].mxu0
        %v616 = vadd.f32 %v281, %v615
        %v617 = vpop.f32.mrb[0].mxu0
        %618 = vdwg.mxu0
        %v619 = vtanh.pop %v557
        %v620 = vtanh.pop %v560
        %v621 = vtanh.pop %v565
        %v622 = vtanh.pop %v568
        %v623 = vtanh.pop %v573
        %v624 = vtanh.pop %v576
        %v625 = vtanh.pop %v581
        %v626 = vtanh.pop %v584
        %v627 = vtanh.pop %v589
        %v628 = vtanh.pop %v592
        %v629 = vtanh.pop %v597
        %v630 = vtanh.pop %v600
        %v631 = vtanh.pop %v605
        %v632 = vtanh.pop %v608
        %v633 = vtanh.pop %v613
        %v634 = vtanh.pop %v616
        %v635 = vmul.f32 %v619, %v448
        %v636 = vmul.f32 %v620, %v448
        %v637 = vmul.f32 %v621, %v448
        %v638 = vmul.f32 %v622, %v448
        %v639 = vmul.f32 %v623, %v448
        %v640 = vmul.f32 %v624, %v448
        %v641 = vmul.f32 %v625, %v448
        %v642 = vmul.f32 %v626, %v448
        %v643 = vmul.f32 %v627, %v448
        %v644 = vmul.f32 %v628, %v448
        %v645 = vmul.f32 %v629, %v448
        %v646 = vmul.f32 %v630, %v448
        %v647 = vmul.f32 %v631, %v448
        %v648 = vmul.f32 %v632, %v448
        %v649 = vmul.f32 %v633, %v448
        %v650 = vmul.f32 %v634, %v448
        %651 = vadd.xlane.f32.xlu0 %v635
        %v652 = vpop.xlane.xlu0 %651
        %653 = vadd.xlane.f32.xlu0 %v636
        %v654 = vpop.xlane.xlu0 %653
        %655 = vadd.xlane.f32.xlu0 %v637
        %v656 = vpop.xlane.xlu0 %655
        %657 = vadd.xlane.f32.xlu0 %v638
        %v658 = vpop.xlane.xlu0 %657
        %659 = vadd.xlane.f32.xlu0 %v639
        %v660 = vpop.xlane.xlu0 %659
        %661 = vadd.xlane.f32.xlu0 %v640
        %v662 = vpop.xlane.xlu0 %661
        %663 = vadd.xlane.f32.xlu0 %v641
        %v664 = vpop.xlane.xlu0 %663
        %665 = vadd.xlane.f32.xlu0 %v642
        %v666 = vpop.xlane.xlu0 %665
        %667 = vadd.xlane.f32.xlu0 %v643
        %v668 = vpop.xlane.xlu0 %667
        %669 = vadd.xlane.f32.xlu0 %v644
        %v670 = vpop.xlane.xlu0 %669
        %671 = vadd.xlane.f32.xlu0 %v645
        %v672 = vpop.xlane.xlu0 %671
        %673 = vadd.xlane.f32.xlu0 %v646
        %v674 = vpop.xlane.xlu0 %673
        %675 = vadd.xlane.f32.xlu0 %v647
        %v676 = vpop.xlane.xlu0 %675
        %677 = vadd.xlane.f32.xlu0 %v648
        %v678 = vpop.xlane.xlu0 %677
        %679 = vadd.xlane.f32.xlu0 %v649
        %v680 = vpop.xlane.xlu0 %679
        %681 = vadd.xlane.f32.xlu0 %v650
        %v682 = vpop.xlane.xlu0 %681
        %v683 = vld [vmem:[%s203 + $0x10] sm:$0xff]
        %v684 = vld [vmem:[%s203 + $0x30] sm:$0xff]
        %v685 = vld [vmem:[%s203 + $0x50] sm:$0xff]
        %v686 = vld [vmem:[%s203 + $0x70] sm:$0xff]
        %v687 = vld [vmem:[%s203 + $0x90] sm:$0xff]
        %v688 = vld [vmem:[%s203 + $0xb0] sm:$0xff]
        %v689 = vld [vmem:[%s203 + $0xd0] sm:$0xff]
        %v690 = vld [vmem:[%s203 + $0xf0] sm:$0xff]
        %v691 = vld [vmem:[%s203 + $0x110] sm:$0xff]
        %v692 = vld [vmem:[%s203 + $0x130] sm:$0xff]
        %v693 = vld [vmem:[%s203 + $0x150] sm:$0xff]
        %v694 = vld [vmem:[%s203 + $0x170] sm:$0xff]
        %v695 = vld [vmem:[%s203 + $0x190] sm:$0xff]
        %v696 = vld [vmem:[%s203 + $0x1b0] sm:$0xff]
        %v697 = vld [vmem:[%s203 + $0x1d0] sm:$0xff]
        %v698 = vld [vmem:[%s203 + $0x1f0] sm:$0xff]
        %v699 = vpack.c.bf16 %v684, %v683
        %v700 = vpack.c.bf16 %v686, %v685
        %v701 = vpack.c.bf16 %v688, %v687
        %v702 = vpack.c.bf16 %v690, %v689
        %v703 = vpack.c.bf16 %v692, %v691
        %v704 = vpack.c.bf16 %v694, %v693
        %v705 = vpack.c.bf16 %v696, %v695
        %v706 = vpack.c.bf16 %v698, %v697
        %707 = vmatprep.subr.bf16.mxu0 0
        %708 = vmatpush1.bf16.xpose.msra.mxu0 %v315
        %709 = vmatprep.subr.bf16.mxu0 0
        %710 = vmatpush1.bf16.xpose.msra.mxu0 %v316
        %711 = vmatprep.subr.bf16.mxu0 0
        %712 = vmatpush1.bf16.xpose.msra.mxu0 %v317
        %713 = vmatprep.subr.bf16.mxu0 0
        %714 = vmatpush1.bf16.xpose.msra.mxu0 %v318
        %715 = vmatprep.subr.bf16.mxu0 0
        %716 = vmatpush1.bf16.xpose.msra.mxu0 %v319
        %717 = vmatprep.subr.bf16.mxu0 0
        %718 = vmatpush1.bf16.xpose.msra.mxu0 %v320
        %719 = vmatprep.subr.bf16.mxu0 0
        %720 = vmatpush1.bf16.xpose.msra.mxu0 %v321
        %721 = vmatprep.subr.bf16.mxu0 0
        %722 = vmatpush1.bf16.xpose.msra.mxu0 %v322
        %723 = vmatprep.subr.bf16.mxu0 0
        %724 = vmatpush1.bf16.xpose.msra.mxu0 0
        %725 = vmatprep.subr.bf16.mxu0 0
        %726 = vmatpush1.bf16.xpose.msra.mxu0 0
        %727 = vmatprep.subr.bf16.mxu0 0
        %728 = vmatpush1.bf16.xpose.msra.mxu0 0
        %729 = vmatprep.subr.bf16.mxu0 0
        %730 = vmatpush1.bf16.xpose.msra.mxu0 0
        %731 = vmatprep.subr.bf16.mxu0 0
        %732 = vmatpush1.bf16.xpose.msra.mxu0 0
        %733 = vmatprep.subr.bf16.mxu0 0
        %734 = vmatpush1.bf16.xpose.msra.mxu0 0
        %735 = vmatprep.subr.bf16.mxu0 0
        %736 = vmatpush1.bf16.xpose.msra.mxu0 0
        %737 = vmatprep.subr.bf16.mxu0 0
        %738 = vmatpush1.bf16.xpose.msra.mxu0 0
        %739 = vmatprep.mubr.bf16.mxu0 0
        %740 = vmatmul.mubr.bf16.gmra.mrb[0].mxu0 %v699
        %v741 = vpop.f32.mrb[0].mxu0
        %v742 = vadd.f32 %v281, %v741
        %v743 = vpop.f32.mrb[0].mxu0
        %v744 = vpop.f32.mrb[0].mxu0
        %v745 = vadd.f32 %v281, %v744
        %v746 = vpop.f32.mrb[0].mxu0
        %747 = vmatprep.mubr.bf16.mxu0 0
        %748 = vmatmul.mubr.bf16.gmra.mrb[0].mxu0 %v700
        %v749 = vpop.f32.mrb[0].mxu0
        %v750 = vadd.f32 %v281, %v749
        %v751 = vpop.f32.mrb[0].mxu0
        %v752 = vpop.f32.mrb[0].mxu0
        %v753 = vadd.f32 %v281, %v752
        %v754 = vpop.f32.mrb[0].mxu0
        %755 = vmatprep.mubr.bf16.mxu0 0
        %756 = vmatmul.mubr.bf16.gmra.mrb[0].mxu0 %v701
        %v757 = vpop.f32.mrb[0].mxu0
        %v758 = vadd.f32 %v281, %v757
        %v759 = vpop.f32.mrb[0].mxu0
        %v760 = vpop.f32.mrb[0].mxu0
        %v761 = vadd.f32 %v281, %v760
        %v762 = vpop.f32.mrb[0].mxu0
        %763 = vmatprep.mubr.bf16.mxu0 0
        %764 = vmatmul.mubr.bf16.gmra.mrb[0].mxu0 %v702
        %v765 = vpop.f32.mrb[0].mxu0
        %v766 = vadd.f32 %v281, %v765
        %v767 = vpop.f32.mrb[0].mxu0
        %v768 = vpop.f32.mrb[0].mxu0
        %v769 = vadd.f32 %v281, %v768
        %v770 = vpop.f32.mrb[0].mxu0
        %771 = vmatprep.mubr.bf16.mxu0 0
        %772 = vmatmul.mubr.bf16.gmra.mrb[0].mxu0 %v703
        %v773 = vpop.f32.mrb[0].mxu0
        %v774 = vadd.f32 %v281, %v773
        %v775 = vpop.f32.mrb[0].mxu0
        %v776 = vpop.f32.mrb[0].mxu0
        %v777 = vadd.f32 %v281, %v776
        %v778 = vpop.f32.mrb[0].mxu0
        %779 = vmatprep.mubr.bf16.mxu0 0
        %780 = vmatmul.mubr.bf16.gmra.mrb[0].mxu0 %v704
        %v781 = vpop.f32.mrb[0].mxu0
        %v782 = vadd.f32 %v281, %v781
        %v783 = vpop.f32.mrb[0].mxu0
        %v784 = vpop.f32.mrb[0].mxu0
        %v785 = vadd.f32 %v281, %v784
        %v786 = vpop.f32.mrb[0].mxu0
        %787 = vmatprep.mubr.bf16.mxu0 0
        %788 = vmatmul.mubr.bf16.gmra.mrb[0].mxu0 %v705
        %v789 = vpop.f32.mrb[0].mxu0
        %v790 = vadd.f32 %v281, %v789
        %v791 = vpop.f32.mrb[0].mxu0
        %v792 = vpop.f32.mrb[0].mxu0
        %v793 = vadd.f32 %v281, %v792
        %v794 = vpop.f32.mrb[0].mxu0
        %795 = vmatprep.mubr.bf16.mxu0 0
        %796 = vmatmul.mubr.bf16.gmra.mrb[0].mxu0 %v706
        %v797 = vpop.f32.mrb[0].mxu0
        %v798 = vadd.f32 %v281, %v797
        %v799 = vpop.f32.mrb[0].mxu0
        %v800 = vpop.f32.mrb[0].mxu0
        %v801 = vadd.f32 %v281, %v800
        %v802 = vpop.f32.mrb[0].mxu0
        %803 = vdwg.mxu0
        %v804 = vtanh.pop %v742
        %v805 = vtanh.pop %v745
        %v806 = vtanh.pop %v750
        %v807 = vtanh.pop %v753
        %v808 = vtanh.pop %v758
        %v809 = vtanh.pop %v761
        %v810 = vtanh.pop %v766
        %v811 = vtanh.pop %v769
        %v812 = vtanh.pop %v774
        %v813 = vtanh.pop %v777
        %v814 = vtanh.pop %v782
        %v815 = vtanh.pop %v785
        %v816 = vtanh.pop %v790
        %v817 = vtanh.pop %v793
        %v818 = vtanh.pop %v798
        %v819 = vtanh.pop %v801
        %v820 = vmul.f32 %v804, %v448
        %v821 = vmul.f32 %v805, %v448
        %v822 = vmul.f32 %v806, %v448
        %v823 = vmul.f32 %v807, %v448
        %v824 = vmul.f32 %v808, %v448
        %v825 = vmul.f32 %v809, %v448
        %v826 = vmul.f32 %v810, %v448
        %v827 = vmul.f32 %v811, %v448
        %v828 = vmul.f32 %v812, %v448
        %v829 = vmul.f32 %v813, %v448
        %v830 = vmul.f32 %v814, %v448
        %v831 = vmul.f32 %v815, %v448
        %v832 = vmul.f32 %v816, %v448
        %v833 = vmul.f32 %v817, %v448
        %v834 = vmul.f32 %v818, %v448
        %v835 = vmul.f32 %v819, %v448
        %836 = vadd.xlane.f32.xlu0 %v820
        %v837 = vpop.xlane.xlu0 %836
        %838 = vadd.xlane.f32.xlu0 %v821
        %v839 = vpop.xlane.xlu0 %838
        %840 = vadd.xlane.f32.xlu0 %v822
        %v841 = vpop.xlane.xlu0 %840
        %842 = vadd.xlane.f32.xlu0 %v823
        %v843 = vpop.xlane.xlu0 %842
        %844 = vadd.xlane.f32.xlu0 %v824
        %v845 = vpop.xlane.xlu0 %844
        %846 = vadd.xlane.f32.xlu0 %v825
        %v847 = vpop.xlane.xlu0 %846
        %848 = vadd.xlane.f32.xlu0 %v826
        %v849 = vpop.xlane.xlu0 %848
        %850 = vadd.xlane.f32.xlu0 %v827
        %v851 = vpop.xlane.xlu0 %850
        %852 = vadd.xlane.f32.xlu0 %v828
        %v853 = vpop.xlane.xlu0 %852
        %854 = vadd.xlane.f32.xlu0 %v829
        %v855 = vpop.xlane.xlu0 %854
        %856 = vadd.xlane.f32.xlu0 %v830
        %v857 = vpop.xlane.xlu0 %856
        %858 = vadd.xlane.f32.xlu0 %v831
        %v859 = vpop.xlane.xlu0 %858
        %860 = vadd.xlane.f32.xlu0 %v832
        %v861 = vpop.xlane.xlu0 %860
        %862 = vadd.xlane.f32.xlu0 %v833
        %v863 = vpop.xlane.xlu0 %862
        %864 = vadd.xlane.f32.xlu0 %v834
        %v865 = vpop.xlane.xlu0 %864
        %866 = vadd.xlane.f32.xlu0 %v835
        %v867 = vpop.xlane.xlu0 %866
        %v868 = vld [vmem:[%s203 + $0x18] sm:$0xff]
        %v869 = vld [vmem:[%s203 + $0x38] sm:$0xff]
        %v870 = vld [vmem:[%s203 + $0x58] sm:$0xff]
        %v871 = vld [vmem:[%s203 + $0x78] sm:$0xff]
        %v872 = vld [vmem:[%s203 + $0x98] sm:$0xff]
        %v873 = vld [vmem:[%s203 + $0xb8] sm:$0xff]
        %v874 = vld [vmem:[%s203 + $0xd8] sm:$0xff]
        %v875 = vld [vmem:[%s203 + $0xf8] sm:$0xff]
        %v876 = vld [vmem:[%s203 + $0x118] sm:$0xff]
        %v877 = vld [vmem:[%s203 + $0x138] sm:$0xff]
        %v878 = vld [vmem:[%s203 + $0x158] sm:$0xff]
        %v879 = vld [vmem:[%s203 + $0x178] sm:$0xff]
        %v880 = vld [vmem:[%s203 + $0x198] sm:$0xff]
        %v881 = vld [vmem:[%s203 + $0x1b8] sm:$0xff]
        %v882 = vld [vmem:[%s203 + $0x1d8] sm:$0xff]
        %v883 = vld [vmem:[%s203 + $0x1f8] sm:$0xff]
        %v884 = vpack.c.bf16 %v869, %v868
        %v885 = vpack.c.bf16 %v871, %v870
        %v886 = vpack.c.bf16 %v873, %v872
        %v887 = vpack.c.bf16 %v875, %v874
        %v888 = vpack.c.bf16 %v877, %v876
        %v889 = vpack.c.bf16 %v879, %v878
        %v890 = vpack.c.bf16 %v881, %v880
        %v891 = vpack.c.bf16 %v883, %v882
        %892 = vmatprep.subr.bf16.mxu0 0
        %893 = vmatpush1.bf16.xpose.msra.mxu0 %v315
        %894 = vmatprep.subr.bf16.mxu0 0
        %895 = vmatpush1.bf16.xpose.msra.mxu0 %v316
        %896 = vmatprep.subr.bf16.mxu0 0
        %897 = vmatpush1.bf16.xpose.msra.mxu0 %v317
        %898 = vmatprep.subr.bf16.mxu0 0
        %899 = vmatpush1.bf16.xpose.msra.mxu0 %v318
        %900 = vmatprep.subr.bf16.mxu0 0
        %901 = vmatpush1.bf16.xpose.msra.mxu0 %v319
        %902 = vmatprep.subr.bf16.mxu0 0
        %903 = vmatpush1.bf16.xpose.msra.mxu0 %v320
        %904 = vmatprep.subr.bf16.mxu0 0
        %905 = vmatpush1.bf16.xpose.msra.mxu0 %v321
        %906 = vmatprep.subr.bf16.mxu0 0
        %907 = vmatpush1.bf16.xpose.msra.mxu0 %v322
        %908 = vmatprep.subr.bf16.mxu0 0
        %909 = vmatpush1.bf16.xpose.msra.mxu0 0
        %910 = vmatprep.subr.bf16.mxu0 0
        %911 = vmatpush1.bf16.xpose.msra.mxu0 0
        %912 = vmatprep.subr.bf16.mxu0 0
        %913 = vmatpush1.bf16.xpose.msra.mxu0 0
        %914 = vmatprep.subr.bf16.mxu0 0
        %915 = vmatpush1.bf16.xpose.msra.mxu0 0
        %916 = vmatprep.subr.bf16.mxu0 0
        %917 = vmatpush1.bf16.xpose.msra.mxu0 0
        %918 = vmatprep.subr.bf16.mxu0 0
        %919 = vmatpush1.bf16.xpose.msra.mxu0 0
        %920 = vmatprep.subr.bf16.mxu0 0
        %921 = vmatpush1.bf16.xpose.msra.mxu0 0
        %922 = vmatprep.subr.bf16.mxu0 0
        %923 = vmatpush1.bf16.xpose.msra.mxu0 0
        %924 = vmatprep.mubr.bf16.mxu0 0
        %925 = vmatmul.mubr.bf16.gmra.mrb[0].mxu0 %v884
        %v926 = vpop.f32.mrb[0].mxu0
        %v927 = vadd.f32 %v281, %v926
        %v928 = vpop.f32.mrb[0].mxu0
        %v929 = vpop.f32.mrb[0].mxu0
        %v930 = vadd.f32 %v281, %v929
        %v931 = vpop.f32.mrb[0].mxu0
        %932 = vmatprep.mubr.bf16.mxu0 0
        %933 = vmatmul.mubr.bf16.gmra.mrb[0].mxu0 %v885
        %v934 = vpop.f32.mrb[0].mxu0
        %v935 = vadd.f32 %v281, %v934
        %v936 = vpop.f32.mrb[0].mxu0
        %v937 = vpop.f32.mrb[0].mxu0
        %v938 = vadd.f32 %v281, %v937
        %v939 = vpop.f32.mrb[0].mxu0
        %940 = vmatprep.mubr.bf16.mxu0 0
        %941 = vmatmul.mubr.bf16.gmra.mrb[0].mxu0 %v886
        %v942 = vpop.f32.mrb[0].mxu0
        %v943 = vadd.f32 %v281, %v942
        %v944 = vpop.f32.mrb[0].mxu0
        %v945 = vpop.f32.mrb[0].mxu0
        %v946 = vadd.f32 %v281, %v945
        %v947 = vpop.f32.mrb[0].mxu0
        %948 = vmatprep.mubr.bf16.mxu0 0
        %949 = vmatmul.mubr.bf16.gmra.mrb[0].mxu0 %v887
        %v950 = vpop.f32.mrb[0].mxu0
        %v951 = vadd.f32 %v281, %v950
        %v952 = vpop.f32.mrb[0].mxu0
        %v953 = vpop.f32.mrb[0].mxu0
        %v954 = vadd.f32 %v281, %v953
        %v955 = vpop.f32.mrb[0].mxu0
        %956 = vmatprep.mubr.bf16.mxu0 0
        %957 = vmatmul.mubr.bf16.gmra.mrb[0].mxu0 %v888
        %v958 = vpop.f32.mrb[0].mxu0
        %v959 = vadd.f32 %v281, %v958
        %v960 = vpop.f32.mrb[0].mxu0
        %v961 = vpop.f32.mrb[0].mxu0
        %v962 = vadd.f32 %v281, %v961
        %v963 = vpop.f32.mrb[0].mxu0
        %964 = vmatprep.mubr.bf16.mxu0 0
        %965 = vmatmul.mubr.bf16.gmra.mrb[0].mxu0 %v889
        %v966 = vpop.f32.mrb[0].mxu0
        %v967 = vadd.f32 %v281, %v966
        %v968 = vpop.f32.mrb[0].mxu0
        %v969 = vpop.f32.mrb[0].mxu0
        %v970 = vadd.f32 %v281, %v969
        %v971 = vpop.f32.mrb[0].mxu0
        %972 = vmatprep.mubr.bf16.mxu0 0
        %973 = vmatmul.mubr.bf16.gmra.mrb[0].mxu0 %v890
        %v974 = vpop.f32.mrb[0].mxu0
        %v975 = vadd.f32 %v281, %v974
        %v976 = vpop.f32.mrb[0].mxu0
        %v977 = vpop.f32.mrb[0].mxu0
        %v978 = vadd.f32 %v281, %v977
        %v979 = vpop.f32.mrb[0].mxu0
        %980 = vmatprep.mubr.bf16.mxu0 0
        %981 = vmatmul.mubr.bf16.gmra.mrb[0].mxu0 %v891
        %v982 = vpop.f32.mrb[0].mxu0
        %v983 = vadd.f32 %v281, %v982
        %v984 = vpop.f32.mrb[0].mxu0
        %v985 = vpop.f32.mrb[0].mxu0
        %v986 = vadd.f32 %v281, %v985
        %v987 = vpop.f32.mrb[0].mxu0
        %988 = vdwg.mxu0
        %v989 = vtanh.pop %v927
        %v990 = vtanh.pop %v930
        %v991 = vtanh.pop %v935
        %v992 = vtanh.pop %v938
        %v993 = vtanh.pop %v943
        %v994 = vtanh.pop %v946
        %v995 = vtanh.pop %v951
        %v996 = vtanh.pop %v954
        %v997 = vtanh.pop %v959
        %v998 = vtanh.pop %v962
        %v999 = vtanh.pop %v967
        %v1000 = vtanh.pop %v970
        %v1001 = vtanh.pop %v975
        %v1002 = vtanh.pop %v978
        %v1003 = vtanh.pop %v983
        %v1004 = vtanh.pop %v986
        %v1005 = vmul.f32 %v989, %v448
        %v1006 = vmul.f32 %v990, %v448
        %v1007 = vmul.f32 %v991, %v448
        %v1008 = vmul.f32 %v992, %v448
        %v1009 = vmul.f32 %v993, %v448
        %v1010 = vmul.f32 %v994, %v448
        %v1011 = vmul.f32 %v995, %v448
        %v1012 = vmul.f32 %v996, %v448
        %v1013 = vmul.f32 %v997, %v448
        %v1014 = vmul.f32 %v998, %v448
        %v1015 = vmul.f32 %v999, %v448
        %v1016 = vmul.f32 %v1000, %v448
        %v1017 = vmul.f32 %v1001, %v448
        %v1018 = vmul.f32 %v1002, %v448
        %v1019 = vmul.f32 %v1003, %v448
        %v1020 = vmul.f32 %v1004, %v448
        %1021 = vadd.xlane.f32.xlu0 %v1005
        %v1022 = vpop.xlane.xlu0 %1021
        %1023 = vadd.xlane.f32.xlu0 %v1006
        %v1024 = vpop.xlane.xlu0 %1023
        %1025 = vadd.xlane.f32.xlu0 %v1007
        %v1026 = vpop.xlane.xlu0 %1025
        %1027 = vadd.xlane.f32.xlu0 %v1008
        %v1028 = vpop.xlane.xlu0 %1027
        %1029 = vadd.xlane.f32.xlu0 %v1009
        %v1030 = vpop.xlane.xlu0 %1029
        %1031 = vadd.xlane.f32.xlu0 %v1010
        %v1032 = vpop.xlane.xlu0 %1031
        %1033 = vadd.xlane.f32.xlu0 %v1011
        %v1034 = vpop.xlane.xlu0 %1033
        %1035 = vadd.xlane.f32.xlu0 %v1012
        %v1036 = vpop.xlane.xlu0 %1035
        %1037 = vadd.xlane.f32.xlu0 %v1013
        %v1038 = vpop.xlane.xlu0 %1037
        %1039 = vadd.xlane.f32.xlu0 %v1014
        %v1040 = vpop.xlane.xlu0 %1039
        %1041 = vadd.xlane.f32.xlu0 %v1015
        %v1042 = vpop.xlane.xlu0 %1041
        %1043 = vadd.xlane.f32.xlu0 %v1016
        %v1044 = vpop.xlane.xlu0 %1043
        %1045 = vadd.xlane.f32.xlu0 %v1017
        %v1046 = vpop.xlane.xlu0 %1045
        %1047 = vadd.xlane.f32.xlu0 %v1018
        %v1048 = vpop.xlane.xlu0 %1047
        %1049 = vadd.xlane.f32.xlu0 %v1019
        %v1050 = vpop.xlane.xlu0 %1049
        %1051 = vadd.xlane.f32.xlu0 %v1020
        %v1052 = vpop.xlane.xlu0 %1051
        %v1053 = vmax.f32 %v467, %v652
        %v1054 = vmax.f32 %v469, %v654
        %v1055 = vmax.f32 %v471, %v656
        %v1056 = vmax.f32 %v473, %v658
        %v1057 = vmax.f32 %v475, %v660
        %v1058 = vmax.f32 %v477, %v662
        %v1059 = vmax.f32 %v479, %v664
        %v1060 = vmax.f32 %v481, %v666
        %v1061 = vmax.f32 %v483, %v668
        %v1062 = vmax.f32 %v485, %v670
        %v1063 = vmax.f32 %v487, %v672
        %v1064 = vmax.f32 %v489, %v674
        %v1065 = vmax.f32 %v491, %v676
        %v1066 = vmax.f32 %v493, %v678
        %v1067 = vmax.f32 %v495, %v680
        %v1068 = vmax.f32 %v497, %v682
        %v1069 = vmax.f32 %v1053, %v837
        %v1070 = vmax.f32 %v1054, %v839
        %v1071 = vmax.f32 %v1055, %v841
        %v1072 = vmax.f32 %v1056, %v843
        %v1073 = vmax.f32 %v1057, %v845
        %v1074 = vmax.f32 %v1058, %v847
        %v1075 = vmax.f32 %v1059, %v849
        %v1076 = vmax.f32 %v1060, %v851
        %v1077 = vmax.f32 %v1061, %v853
        %v1078 = vmax.f32 %v1062, %v855
        %v1079 = vmax.f32 %v1063, %v857
        %v1080 = vmax.f32 %v1064, %v859
        %v1081 = vmax.f32 %v1065, %v861
        %v1082 = vmax.f32 %v1066, %v863
        %v1083 = vmax.f32 %v1067, %v865
        %v1084 = vmax.f32 %v1068, %v867
        %v1085 = vmax.f32 %v1069, %v1022
        %v1086 = vmax.f32 %v1070, %v1024
        %v1087 = vmax.f32 %v1071, %v1026
        %v1088 = vmax.f32 %v1072, %v1028
        %v1089 = vmax.f32 %v1073, %v1030
        %v1090 = vmax.f32 %v1074, %v1032
        %v1091 = vmax.f32 %v1075, %v1034
        %v1092 = vmax.f32 %v1076, %v1036
        %v1093 = vmax.f32 %v1077, %v1038
        %v1094 = vmax.f32 %v1078, %v1040
        %v1095 = vmax.f32 %v1079, %v1042
        %v1096 = vmax.f32 %v1080, %v1044
        %v1097 = vmax.f32 %v1081, %v1046
        %v1098 = vmax.f32 %v1082, %v1048
        %v1099 = vmax.f32 %v1083, %v1050
        %v1100 = vmax.f32 %v1084, %v1052
        %v1101 = vsub.f32 %v467, %v1085
        %v1102 = vsub.f32 %v469, %v1086
        %v1103 = vsub.f32 %v471, %v1087
        %v1104 = vsub.f32 %v473, %v1088
        %v1105 = vsub.f32 %v475, %v1089
        %v1106 = vsub.f32 %v477, %v1090
        %v1107 = vsub.f32 %v479, %v1091
        %v1108 = vsub.f32 %v481, %v1092
        %v1109 = vsub.f32 %v483, %v1093
        %v1110 = vsub.f32 %v485, %v1094
        %v1111 = vsub.f32 %v487, %v1095
        %v1112 = vsub.f32 %v489, %v1096
        %v1113 = vsub.f32 %v491, %v1097
        %v1114 = vsub.f32 %v493, %v1098
        %v1115 = vsub.f32 %v495, %v1099
        %v1116 = vsub.f32 %v497, %v1100
        %v1117 = vmul.f32 %v1101, 1.442695
        %v1118 = vpow.pop %v1117
        %v1119 = vmul.f32 %v1102, 1.442695
        %v1120 = vpow.pop %v1119
        %v1121 = vmul.f32 %v1103, 1.442695
        %v1122 = vpow.pop %v1121
        %v1123 = vmul.f32 %v1104, 1.442695
        %v1124 = vpow.pop %v1123
        %v1125 = vmul.f32 %v1105, 1.442695
        %v1126 = vpow.pop %v1125
        %v1127 = vmul.f32 %v1106, 1.442695
        %v1128 = vpow.pop %v1127
        %v1129 = vmul.f32 %v1107, 1.442695
        %v1130 = vpow.pop %v1129
        %v1131 = vmul.f32 %v1108, 1.442695
        %v1132 = vpow.pop %v1131
        %v1133 = vmul.f32 %v1109, 1.442695
        %v1134 = vpow.pop %v1133
        %v1135 = vmul.f32 %v1110, 1.442695
        %v1136 = vpow.pop %v1135
        %v1137 = vmul.f32 %v1111, 1.442695
        %v1138 = vpow.pop %v1137
        %v1139 = vmul.f32 %v1112, 1.442695
        %v1140 = vpow.pop %v1139
        %v1141 = vmul.f32 %v1113, 1.442695
        %v1142 = vpow.pop %v1141
        %v1143 = vmul.f32 %v1114, 1.442695
        %v1144 = vpow.pop %v1143
        %v1145 = vmul.f32 %v1115, 1.442695
        %v1146 = vpow.pop %v1145
        %v1147 = vmul.f32 %v1116, 1.442695
        %v1148 = vpow.pop %v1147
        %v1149 = vsub.f32 %v652, %v1085
        %v1150 = vsub.f32 %v654, %v1086
        %v1151 = vsub.f32 %v656, %v1087
        %v1152 = vsub.f32 %v658, %v1088
        %v1153 = vsub.f32 %v660, %v1089
        %v1154 = vsub.f32 %v662, %v1090
        %v1155 = vsub.f32 %v664, %v1091
        %v1156 = vsub.f32 %v666, %v1092
        %v1157 = vsub.f32 %v668, %v1093
        %v1158 = vsub.f32 %v670, %v1094
        %v1159 = vsub.f32 %v672, %v1095
        %v1160 = vsub.f32 %v674, %v1096
        %v1161 = vsub.f32 %v676, %v1097
        %v1162 = vsub.f32 %v678, %v1098
        %v1163 = vsub.f32 %v680, %v1099
        %v1164 = vsub.f32 %v682, %v1100
        %v1165 = vmul.f32 %v1149, 1.442695
        %v1166 = vpow.pop %v1165
        %v1167 = vmul.f32 %v1150, 1.442695
        %v1168 = vpow.pop %v1167
        %v1169 = vmul.f32 %v1151, 1.442695
        %v1170 = vpow.pop %v1169
        %v1171 = vmul.f32 %v1152, 1.442695
        %v1172 = vpow.pop %v1171
        %v1173 = vmul.f32 %v1153, 1.442695
        %v1174 = vpow.pop %v1173
        %v1175 = vmul.f32 %v1154, 1.442695
        %v1176 = vpow.pop %v1175
        %v1177 = vmul.f32 %v1155, 1.442695
        %v1178 = vpow.pop %v1177
        %v1179 = vmul.f32 %v1156, 1.442695
        %v1180 = vpow.pop %v1179
        %v1181 = vmul.f32 %v1157, 1.442695
        %v1182 = vpow.pop %v1181
        %v1183 = vmul.f32 %v1158, 1.442695
        %v1184 = vpow.pop %v1183
        %v1185 = vmul.f32 %v1159, 1.442695
        %v1186 = vpow.pop %v1185
        %v1187 = vmul.f32 %v1160, 1.442695
        %v1188 = vpow.pop %v1187
        %v1189 = vmul.f32 %v1161, 1.442695
        %v1190 = vpow.pop %v1189
        %v1191 = vmul.f32 %v1162, 1.442695
        %v1192 = vpow.pop %v1191
        %v1193 = vmul.f32 %v1163, 1.442695
        %v1194 = vpow.pop %v1193
        %v1195 = vmul.f32 %v1164, 1.442695
        %v1196 = vpow.pop %v1195
        %v1197 = vsub.f32 %v837, %v1085
        %v1198 = vsub.f32 %v839, %v1086
        %v1199 = vsub.f32 %v841, %v1087
        %v1200 = vsub.f32 %v843, %v1088
        %v1201 = vsub.f32 %v845, %v1089
        %v1202 = vsub.f32 %v847, %v1090
        %v1203 = vsub.f32 %v849, %v1091
        %v1204 = vsub.f32 %v851, %v1092
        %v1205 = vsub.f32 %v853, %v1093
        %v1206 = vsub.f32 %v855, %v1094
        %v1207 = vsub.f32 %v857, %v1095
        %v1208 = vsub.f32 %v859, %v1096
        %v1209 = vsub.f32 %v861, %v1097
        %v1210 = vsub.f32 %v863, %v1098
        %v1211 = vsub.f32 %v865, %v1099
        %v1212 = vsub.f32 %v867, %v1100
        %v1213 = vmul.f32 %v1197, 1.442695
        %v1214 = vpow.pop %v1213
        %v1215 = vmul.f32 %v1198, 1.442695
        %v1216 = vpow.pop %v1215
        %v1217 = vmul.f32 %v1199, 1.442695
        %v1218 = vpow.pop %v1217
        %v1219 = vmul.f32 %v1200, 1.442695
        %v1220 = vpow.pop %v1219
        %v1221 = vmul.f32 %v1201, 1.442695
        %v1222 = vpow.pop %v1221
        %v1223 = vmul.f32 %v1202, 1.442695
        %v1224 = vpow.pop %v1223
        %v1225 = vmul.f32 %v1203, 1.442695
        %v1226 = vpow.pop %v1225
        %v1227 = vmul.f32 %v1204, 1.442695
        %v1228 = vpow.pop %v1227
        %v1229 = vmul.f32 %v1205, 1.442695
        %v1230 = vpow.pop %v1229
        %v1231 = vmul.f32 %v1206, 1.442695
        %v1232 = vpow.pop %v1231
        %v1233 = vmul.f32 %v1207, 1.442695
        %v1234 = vpow.pop %v1233
        %v1235 = vmul.f32 %v1208, 1.442695
        %v1236 = vpow.pop %v1235
        %v1237 = vmul.f32 %v1209, 1.442695
        %v1238 = vpow.pop %v1237
        %v1239 = vmul.f32 %v1210, 1.442695
        %v1240 = vpow.pop %v1239
        %v1241 = vmul.f32 %v1211, 1.442695
        %v1242 = vpow.pop %v1241
        %v1243 = vmul.f32 %v1212, 1.442695
        %v1244 = vpow.pop %v1243
        %v1245 = vsub.f32 %v1022, %v1085
        %v1246 = vsub.f32 %v1024, %v1086
        %v1247 = vsub.f32 %v1026, %v1087
        %v1248 = vsub.f32 %v1028, %v1088
        %v1249 = vsub.f32 %v1030, %v1089
        %v1250 = vsub.f32 %v1032, %v1090
        %v1251 = vsub.f32 %v1034, %v1091
        %v1252 = vsub.f32 %v1036, %v1092
        %v1253 = vsub.f32 %v1038, %v1093
        %v1254 = vsub.f32 %v1040, %v1094
        %v1255 = vsub.f32 %v1042, %v1095
        %v1256 = vsub.f32 %v1044, %v1096
        %v1257 = vsub.f32 %v1046, %v1097
        %v1258 = vsub.f32 %v1048, %v1098
        %v1259 = vsub.f32 %v1050, %v1099
        %v1260 = vsub.f32 %v1052, %v1100
        %v1261 = vmul.f32 %v1245, 1.442695
        %v1262 = vpow.pop %v1261
        %v1263 = vmul.f32 %v1246, 1.442695
        %v1264 = vpow.pop %v1263
        %v1265 = vmul.f32 %v1247, 1.442695
        %v1266 = vpow.pop %v1265
        %v1267 = vmul.f32 %v1248, 1.442695
        %v1268 = vpow.pop %v1267
        %v1269 = vmul.f32 %v1249, 1.442695
        %v1270 = vpow.pop %v1269
        %v1271 = vmul.f32 %v1250, 1.442695
        %v1272 = vpow.pop %v1271
        %v1273 = vmul.f32 %v1251, 1.442695
        %v1274 = vpow.pop %v1273
        %v1275 = vmul.f32 %v1252, 1.442695
        %v1276 = vpow.pop %v1275
        %v1277 = vmul.f32 %v1253, 1.442695
        %v1278 = vpow.pop %v1277
        %v1279 = vmul.f32 %v1254, 1.442695
        %v1280 = vpow.pop %v1279
        %v1281 = vmul.f32 %v1255, 1.442695
        %v1282 = vpow.pop %v1281
        %v1283 = vmul.f32 %v1256, 1.442695
        %v1284 = vpow.pop %v1283
        %v1285 = vmul.f32 %v1257, 1.442695
        %v1286 = vpow.pop %v1285
        %v1287 = vmul.f32 %v1258, 1.442695
        %v1288 = vpow.pop %v1287
        %v1289 = vmul.f32 %v1259, 1.442695
        %v1290 = vpow.pop %v1289
        %v1291 = vmul.f32 %v1260, 1.442695
        %v1292 = vpow.pop %v1291
        %v1293 = vadd.f32 %v1118, %v1166
        %v1294 = vadd.f32 %v1120, %v1168
        %v1295 = vadd.f32 %v1122, %v1170
        %v1296 = vadd.f32 %v1124, %v1172
        %v1297 = vadd.f32 %v1126, %v1174
        %v1298 = vadd.f32 %v1128, %v1176
        %v1299 = vadd.f32 %v1130, %v1178
        %v1300 = vadd.f32 %v1132, %v1180
        %v1301 = vadd.f32 %v1134, %v1182
        %v1302 = vadd.f32 %v1136, %v1184
        %v1303 = vadd.f32 %v1138, %v1186
        %v1304 = vadd.f32 %v1140, %v1188
        %v1305 = vadd.f32 %v1142, %v1190
        %v1306 = vadd.f32 %v1144, %v1192
        %v1307 = vadd.f32 %v1146, %v1194
        %v1308 = vadd.f32 %v1148, %v1196
        %v1309 = vadd.f32 %v1293, %v1214
        %v1310 = vadd.f32 %v1294, %v1216
        %v1311 = vadd.f32 %v1295, %v1218
        %v1312 = vadd.f32 %v1296, %v1220
        %v1313 = vadd.f32 %v1297, %v1222
        %v1314 = vadd.f32 %v1298, %v1224
        %v1315 = vadd.f32 %v1299, %v1226
        %v1316 = vadd.f32 %v1300, %v1228
        %v1317 = vadd.f32 %v1301, %v1230
        %v1318 = vadd.f32 %v1302, %v1232
        %v1319 = vadd.f32 %v1303, %v1234
        %v1320 = vadd.f32 %v1304, %v1236
        %v1321 = vadd.f32 %v1305, %v1238
        %v1322 = vadd.f32 %v1306, %v1240
        %v1323 = vadd.f32 %v1307, %v1242
        %v1324 = vadd.f32 %v1308, %v1244
        %v1325 = vadd.f32 %v1309, %v1262
        %v1326 = vadd.f32 %v1310, %v1264
        %v1327 = vadd.f32 %v1311, %v1266
        %v1328 = vadd.f32 %v1312, %v1268
        %v1329 = vadd.f32 %v1313, %v1270
        %v1330 = vadd.f32 %v1314, %v1272
        %v1331 = vadd.f32 %v1315, %v1274
        %v1332 = vadd.f32 %v1316, %v1276
        %v1333 = vadd.f32 %v1317, %v1278
        %v1334 = vadd.f32 %v1318, %v1280
        %v1335 = vadd.f32 %v1319, %v1282
        %v1336 = vadd.f32 %v1320, %v1284
        %v1337 = vadd.f32 %v1321, %v1286
        %v1338 = vadd.f32 %v1322, %v1288
        %v1339 = vadd.f32 %v1323, %v1290
        %v1340 = vadd.f32 %v1324, %v1292
        %v1341 = vrcp.pop %v1325
        %v1342 = vrcp.pop %v1326
        %v1343 = vrcp.pop %v1327
        %v1344 = vrcp.pop %v1328
        %v1345 = vrcp.pop %v1329
        %v1346 = vrcp.pop %v1330
        %v1347 = vrcp.pop %v1331
        %v1348 = vrcp.pop %v1332
        %v1349 = vrcp.pop %v1333
        %v1350 = vrcp.pop %v1334
        %v1351 = vrcp.pop %v1335
        %v1352 = vrcp.pop %v1336
        %v1353 = vrcp.pop %v1337
        %v1354 = vrcp.pop %v1338
        %v1355 = vrcp.pop %v1339
        %v1356 = vrcp.pop %v1340
        %v1357 = vmul.f32 %v1118, %v1341
        %v1358 = vmul.f32 %v1120, %v1342
        %v1359 = vmul.f32 %v1122, %v1343
        %v1360 = vmul.f32 %v1124, %v1344
        %v1361 = vmul.f32 %v1126, %v1345
        %v1362 = vmul.f32 %v1128, %v1346
        %v1363 = vmul.f32 %v1130, %v1347
        %v1364 = vmul.f32 %v1132, %v1348
        %v1365 = vmul.f32 %v1134, %v1349
        %v1366 = vmul.f32 %v1136, %v1350
        %v1367 = vmul.f32 %v1138, %v1351
        %v1368 = vmul.f32 %v1140, %v1352
        %v1369 = vmul.f32 %v1142, %v1353
        %v1370 = vmul.f32 %v1144, %v1354
        %v1371 = vmul.f32 %v1146, %v1355
        %v1372 = vmul.f32 %v1148, %v1356
        %v1373 = vmul.f32 %v1357, %v253
        %v1374 = vmul.f32 %v1358, %v254
        %v1375 = vmul.f32 %v1359, %v255
        %v1376 = vmul.f32 %v1360, %v256
        %v1377 = vmul.f32 %v1361, %v257
        %v1378 = vmul.f32 %v1362, %v258
        %v1379 = vmul.f32 %v1363, %v259
        %v1380 = vmul.f32 %v1364, %v260
        %v1381 = vmul.f32 %v1365, %v261
        %v1382 = vmul.f32 %v1366, %v262
        %v1383 = vmul.f32 %v1367, %v263
        %v1384 = vmul.f32 %v1368, %v264
        %v1385 = vmul.f32 %v1369, %v265
        %v1386 = vmul.f32 %v1370, %v266
        %v1387 = vmul.f32 %v1371, %v267
        %v1388 = vmul.f32 %v1372, %v268
        %v1389 = vmul.f32 %v1166, %v1341
        %v1390 = vmul.f32 %v1168, %v1342
        %v1391 = vmul.f32 %v1170, %v1343
        %v1392 = vmul.f32 %v1172, %v1344
        %v1393 = vmul.f32 %v1174, %v1345
        %v1394 = vmul.f32 %v1176, %v1346
        %v1395 = vmul.f32 %v1178, %v1347
        %v1396 = vmul.f32 %v1180, %v1348
        %v1397 = vmul.f32 %v1182, %v1349
        %v1398 = vmul.f32 %v1184, %v1350
        %v1399 = vmul.f32 %v1186, %v1351
        %v1400 = vmul.f32 %v1188, %v1352
        %v1401 = vmul.f32 %v1190, %v1353
        %v1402 = vmul.f32 %v1192, %v1354
        %v1403 = vmul.f32 %v1194, %v1355
        %v1404 = vmul.f32 %v1196, %v1356
        %v1405 = vmul.f32 %v1389, %v498
        %v1406 = vmul.f32 %v1390, %v499
        %v1407 = vmul.f32 %v1391, %v500
        %v1408 = vmul.f32 %v1392, %v501
        %v1409 = vmul.f32 %v1393, %v502
        %v1410 = vmul.f32 %v1394, %v503
        %v1411 = vmul.f32 %v1395, %v504
        %v1412 = vmul.f32 %v1396, %v505
        %v1413 = vmul.f32 %v1397, %v506
        %v1414 = vmul.f32 %v1398, %v507
        %v1415 = vmul.f32 %v1399, %v508
        %v1416 = vmul.f32 %v1400, %v509
        %v1417 = vmul.f32 %v1401, %v510
        %v1418 = vmul.f32 %v1402, %v511
        %v1419 = vmul.f32 %v1403, %v512
        %v1420 = vmul.f32 %v1404, %v513
        %v1421 = vadd.f32 %v1373, %v1405
        %v1422 = vadd.f32 %v1374, %v1406
        %v1423 = vadd.f32 %v1375, %v1407
        %v1424 = vadd.f32 %v1376, %v1408
        %v1425 = vadd.f32 %v1377, %v1409
        %v1426 = vadd.f32 %v1378, %v1410
        %v1427 = vadd.f32 %v1379, %v1411
        %v1428 = vadd.f32 %v1380, %v1412
        %v1429 = vadd.f32 %v1381, %v1413
        %v1430 = vadd.f32 %v1382, %v1414
        %v1431 = vadd.f32 %v1383, %v1415
        %v1432 = vadd.f32 %v1384, %v1416
        %v1433 = vadd.f32 %v1385, %v1417
        %v1434 = vadd.f32 %v1386, %v1418
        %v1435 = vadd.f32 %v1387, %v1419
        %v1436 = vadd.f32 %v1388, %v1420
        %v1437 = vmul.f32 %v1214, %v1341
        %v1438 = vmul.f32 %v1216, %v1342
        %v1439 = vmul.f32 %v1218, %v1343
        %v1440 = vmul.f32 %v1220, %v1344
        %v1441 = vmul.f32 %v1222, %v1345
        %v1442 = vmul.f32 %v1224, %v1346
        %v1443 = vmul.f32 %v1226, %v1347
        %v1444 = vmul.f32 %v1228, %v1348
        %v1445 = vmul.f32 %v1230, %v1349
        %v1446 = vmul.f32 %v1232, %v1350
        %v1447 = vmul.f32 %v1234, %v1351
        %v1448 = vmul.f32 %v1236, %v1352
        %v1449 = vmul.f32 %v1238, %v1353
        %v1450 = vmul.f32 %v1240, %v1354
        %v1451 = vmul.f32 %v1242, %v1355
        %v1452 = vmul.f32 %v1244, %v1356
        %v1453 = vmul.f32 %v1437, %v683
        %v1454 = vmul.f32 %v1438, %v684
        %v1455 = vmul.f32 %v1439, %v685
        %v1456 = vmul.f32 %v1440, %v686
        %v1457 = vmul.f32 %v1441, %v687
        %v1458 = vmul.f32 %v1442, %v688
        %v1459 = vmul.f32 %v1443, %v689
        %v1460 = vmul.f32 %v1444, %v690
        %v1461 = vmul.f32 %v1445, %v691
        %v1462 = vmul.f32 %v1446, %v692
        %v1463 = vmul.f32 %v1447, %v693
        %v1464 = vmul.f32 %v1448, %v694
        %v1465 = vmul.f32 %v1449, %v695
        %v1466 = vmul.f32 %v1450, %v696
        %v1467 = vmul.f32 %v1451, %v697
        %v1468 = vmul.f32 %v1452, %v698
        %v1469 = vadd.f32 %v1421, %v1453
        %v1470 = vadd.f32 %v1422, %v1454
        %v1471 = vadd.f32 %v1423, %v1455
        %v1472 = vadd.f32 %v1424, %v1456
        %v1473 = vadd.f32 %v1425, %v1457
        %v1474 = vadd.f32 %v1426, %v1458
        %v1475 = vadd.f32 %v1427, %v1459
        %v1476 = vadd.f32 %v1428, %v1460
        %v1477 = vadd.f32 %v1429, %v1461
        %v1478 = vadd.f32 %v1430, %v1462
        %v1479 = vadd.f32 %v1431, %v1463
        %v1480 = vadd.f32 %v1432, %v1464
        %v1481 = vadd.f32 %v1433, %v1465
        %v1482 = vadd.f32 %v1434, %v1466
        %v1483 = vadd.f32 %v1435, %v1467
        %v1484 = vadd.f32 %v1436, %v1468
        %v1485 = vmul.f32 %v1262, %v1341
        %v1486 = vmul.f32 %v1264, %v1342
        %v1487 = vmul.f32 %v1266, %v1343
        %v1488 = vmul.f32 %v1268, %v1344
        %v1489 = vmul.f32 %v1270, %v1345
        %v1490 = vmul.f32 %v1272, %v1346
        %v1491 = vmul.f32 %v1274, %v1347
        %v1492 = vmul.f32 %v1276, %v1348
        %v1493 = vmul.f32 %v1278, %v1349
        %v1494 = vmul.f32 %v1280, %v1350
        %v1495 = vmul.f32 %v1282, %v1351
        %v1496 = vmul.f32 %v1284, %v1352
        %v1497 = vmul.f32 %v1286, %v1353
        %v1498 = vmul.f32 %v1288, %v1354
        %v1499 = vmul.f32 %v1290, %v1355
        %v1500 = vmul.f32 %v1292, %v1356
        %v1501 = vmul.f32 %v1485, %v868
        %v1502 = vmul.f32 %v1486, %v869
        %v1503 = vmul.f32 %v1487, %v870
        %v1504 = vmul.f32 %v1488, %v871
        %v1505 = vmul.f32 %v1489, %v872
        %v1506 = vmul.f32 %v1490, %v873
        %v1507 = vmul.f32 %v1491, %v874
        %v1508 = vmul.f32 %v1492, %v875
        %v1509 = vmul.f32 %v1493, %v876
        %v1510 = vmul.f32 %v1494, %v877
        %v1511 = vmul.f32 %v1495, %v878
        %v1512 = vmul.f32 %v1496, %v879
        %v1513 = vmul.f32 %v1497, %v880
        %v1514 = vmul.f32 %v1498, %v881
        %v1515 = vmul.f32 %v1499, %v882
        %v1516 = vmul.f32 %v1500, %v883
        %v1517 = vadd.f32 %v1469, %v1501
        %v1518 = vadd.f32 %v1470, %v1502
        %v1519 = vadd.f32 %v1471, %v1503
        %v1520 = vadd.f32 %v1472, %v1504
        %v1521 = vadd.f32 %v1473, %v1505
        %v1522 = vadd.f32 %v1474, %v1506
        %v1523 = vadd.f32 %v1475, %v1507
        %v1524 = vadd.f32 %v1476, %v1508
        %v1525 = vadd.f32 %v1477, %v1509
        %v1526 = vadd.f32 %v1478, %v1510
        %v1527 = vadd.f32 %v1479, %v1511
        %v1528 = vadd.f32 %v1480, %v1512
        %v1529 = vadd.f32 %v1481, %v1513
        %v1530 = vadd.f32 %v1482, %v1514
        %v1531 = vadd.f32 %v1483, %v1515
        %v1532 = vadd.f32 %v1484, %v1516
        %1533 = vst [vmem:[%s231] sm:$0xff] %v1517
        %1534 = vst [vmem:[%s231 + $0x8] sm:$0xff] %v1518
        %1535 = vst [vmem:[%s231 + $0x10] sm:$0xff] %v1519
        %1536 = vst [vmem:[%s231 + $0x18] sm:$0xff] %v1520
        %1537 = vst [vmem:[%s231 + $0x20] sm:$0xff] %v1521
        %1538 = vst [vmem:[%s231 + $0x28] sm:$0xff] %v1522
        %1539 = vst [vmem:[%s231 + $0x30] sm:$0xff] %v1523
        %1540 = vst [vmem:[%s231 + $0x38] sm:$0xff] %v1524
        %1541 = vst [vmem:[%s231 + $0x40] sm:$0xff] %v1525
        %1542 = vst [vmem:[%s231 + $0x48] sm:$0xff] %v1526
        %1543 = vst [vmem:[%s231 + $0x50] sm:$0xff] %v1527
        %1544 = vst [vmem:[%s231 + $0x58] sm:$0xff] %v1528
        %1545 = vst [vmem:[%s231 + $0x60] sm:$0xff] %v1529
        %1546 = vst [vmem:[%s231 + $0x68] sm:$0xff] %v1530
        %1547 = vst [vmem:[%s231 + $0x70] sm:$0xff] %v1531
        %1548 = vst [vmem:[%s231 + $0x78] sm:$0xff] %v1532
        %s1549 = sand.u32 %s119, 1
        %s1550 = scalar_lea.sflag [#allocation4], %s1549
        %s1551 = sand.u32 %s119, 1
        %s1552 = smul.addr %s1551, 128
        %s1553 = scalar_lea.vmem [#allocation7], %s1552
        // Predicated region
        $region45: #{tpu_custom_call.1} parent=35 // pred_check
          %p1554 = pneg %p129
        $region46: #{tpu_custom_call.1} parent=35 // pred_check_branch
          %1556 = sbr.rel (%p1554) target = $region48
        $region47: #{tpu_custom_call.1} parent=35 // pred_region
          %s1557 = smul.u32 16, %s22
          %s1559 = ssub.s32 2048, 2048
          %1560 = vsyncadd %s1550, %s1559
          %s1561 = smul.addr %s1557, 128
          %s1562 = scalar_lea.hbm %s4, %s1561
          %s1563 = sshll.u32 %s1553, 4
          %s1564 = int_to_ptr.vmem [resolvable:$true] %s1563
          %1569 = dma.vmem_to_hbm [thread:$0]  %s1564, 2048, %s1562, %s1550, 128, 128, 8
        $region48: #{tpu_custom_call.1} parent=35 // pred_fallthru
          _
      $region36: #{tpu_custom_call.1} parent=5 // pred_fallthru
        _
      %p1570 = scmp.le.s32.totalorder 2, %s17
      // Predicated region
      $region49: #{tpu_custom_call.1} parent=5 // pred_check
        %p1571 = pneg %p1570
      $region50: #{tpu_custom_call.1} parent=5 // pred_check_branch
        %1573 = sbr.rel (%p1571) target = $region52
      $region51: #{tpu_custom_call.1} parent=5 // pred_region
        %s1574 = ssub.s32 %s17, 2
        // Predicated region
        $region53: #{tpu_custom_call.1} parent=51 // pred_check
          %p1575 = pneg %p135
        $region54: #{tpu_custom_call.1} parent=51 // pred_check_branch
          %1577 = sbr.rel (%p1575) target = $region56
        $region55: #{tpu_custom_call.1} parent=51 // pred_region
          %s1578 = sand.u32 %s120, 1
          %s1579 = scalar_lea.sflag [#allocation4], %s1578
          %s1580 = sand.u32 %s120, 1
          %s1581 = smul.addr %s1580, 128
          %s1582 = scalar_lea.vmem [#allocation7], %s1581
          %1583 = dma.done %s1579, 2048
        $region56: #{tpu_custom_call.1} parent=51 // pred_fallthru
          _
      $region52: #{tpu_custom_call.1} parent=5 // pred_fallthru
        _
    $region6: #{tpu_custom_call.1} parent=1 // loop_footer
      %s21 = sadd.s32 1, %s17
    $region7: #{tpu_custom_call.1} parent=1 // loop_footer_branch
      %16 = sbr.rel target = $region3
    $region8: #{tpu_custom_call.1} parent=1 // loop_exit
      _
    %1584 = vsyncpa [#allocation3], 1
    %s1585 = scalar_lea.sflag [#allocation3], 1
    %1586 = vsyncpa %s1585, 1
    %1587 = vsyncpa [#allocation6], 1
    %1588 = vsyncpa [#allocation4], 1
    %s1589 = scalar_lea.sflag [#allocation4], 1
    %1590 = vsyncpa %s1589, 1

</llo_original>
